<compile_context>
chip_gen: v6e
topology: v6e:2x2x1
jax: 0.10.0
libtpu: 0.0.40
codegen_flags: <defaults>
</compile_context>

<pallas_src>
import functools

import jax
import jax.numpy as jnp
from jax.experimental import pallas as pl
from jax.experimental.pallas import tpu as pltpu


# ----------------------------------------------------------------------------
# helpers
# ----------------------------------------------------------------------------
def _round_up(x, m):
    return ((x + m - 1) // m) * m


def _pad2(x, rows, cols):
    return jnp.pad(x, ((0, rows - x.shape[0]), (0, cols - x.shape[1])))


def _vmem_cap_bytes():
    """~75% of physical VMEM per TensorCore (v7x: 64 MiB, v5e/v6e: 128 MiB)."""
    try:
        phys = pltpu.get_tpu_info().vmem_capacity_bytes
    except Exception:                       # query unavailable -> assume v7x
        phys = 64 * 1024 * 1024
    return int(0.75 * phys)


def _pick_tile(dim_padded, cap):
    """Largest tile <= cap that divides dim_padded with >= 2 tiles (megacore).

    dim_padded is always a multiple of 128, so the 128 fallback always divides.
    """
    for t in (2048, 1024, 512, 256, 128):
        if t <= cap and dim_padded % t == 0 and dim_padded // t >= 2:
            return t
    return 128


# ----------------------------------------------------------------------------
# Pallas kernels
# ----------------------------------------------------------------------------
def _gcn_fused_kernel(a_ref, x_ref, w_ref, b_ref, o_ref, acc_ref, *,
                      tk, apply_relu):
    """acc += A[i,k] @ (X[k] @ W); epilogue adds bias (+ optional relu).

    X and W are whole-array VMEM-resident (constant index_map => DMA'd once);
    the XW k-tile is recomputed per (i, k) step, which is free in the
    HBM-bound regime and avoids writing/re-reading XW through HBM.
    """
    k = pl.program_id(1)

    @pl.when(k == 0)
    def _():
        acc_ref[...] = jnp.zeros_like(acc_ref)

    start = pl.multiple_of(k * tk, tk)
    xw = jnp.dot(x_ref[pl.ds(start, tk), :], w_ref[...],
                 preferred_element_type=jnp.float32).astype(jnp.bfloat16)
    acc_ref[...] += jnp.dot(a_ref[...], xw,
                            preferred_element_type=jnp.float32)

    @pl.when(k == pl.num_programs(1) - 1)
    def _():
        h = acc_ref[...] + b_ref[...]          # f32 epilogue (v5e: no bf16 VPU)
        if apply_relu:
            h = jnp.maximum(h, 0.0)
        o_ref[...] = h.astype(o_ref.dtype)


def _link_predictor_kernel(zs_ref, zd_ref, w1s_ref, w1d_ref, b1_ref, w2_ref,
                           b2_ref, o_ref):
    """scores = relu(zs@W1a + zd@W1b + b1) . w2 + b2  -> lane-dense [1, TE]."""
    h = jnp.dot(zs_ref[...], w1s_ref[...], preferred_element_type=jnp.float32)
    h += jnp.dot(zd_ref[...], w1d_ref[...], preferred_element_type=jnp.float32)
    h = jnp.maximum(h + b1_ref[...], 0.0)
    # Row-dot with wp2 on VPU (mul) + XLU (lane reduce) instead of a 1-column
    # MXU matmul; output written lane-dense.
    s = jnp.sum(h * w2_ref[...], axis=-1) + b2_ref[0, 0]
    o_ref[...] = s.reshape(1, -1).astype(o_ref.dtype)


# ----------------------------------------------------------------------------
# kernel wrappers
# ----------------------------------------------------------------------------
def gcn_layer(a, x, w, b, n_tile, vmem_cap, *, apply_relu):
    """out = A @ (X @ W) + b (optional relu), fused single pallas_call.

    A:[Np,Np] bf16 streamed tile-by-tile; X:[Np,Fp], W:[Fp,Hp] VMEM-resident.
    """
    np_ = a.shape[0]
    fp = x.shape[1]
    hp = w.shape[1]

    need = (2 * n_tile * n_tile * 2          # A, double-buffered
            + 2 * np_ * fp * 2               # resident X (allocation headroom)
            + 2 * fp * hp * 2                # resident W
            + 2 * hp * 4                     # bias
            + 2 * n_tile * hp * 2            # output, double-buffered
            + n_tile * hp * 4)               # f32 accumulator
    vmem_limit = int(min(max(2 * need, 32 * 1024 * 1024), vmem_cap))

    flops = 2 * np_ * np_ * hp + 2 * np_ * fp * hp * (np_ // n_tile)
    bytes_accessed = (np_ * np_ * 2          # A streamed once
                      + np_ * fp * 2         # X DMA'd once
                      + fp * hp * 2 + hp * 4
                      + np_ * hp * 2)        # output written once

    return pl.pallas_call(
        functools.partial(_gcn_fused_kernel, tk=n_tile, apply_relu=apply_relu),
        out_shape=jax.ShapeDtypeStruct((np_, hp), jnp.bfloat16),
        grid_spec=pltpu.PrefetchScalarGridSpec(
            num_scalar_prefetch=0,
            grid=(np_ // n_tile, np_ // n_tile),
            in_specs=[pl.BlockSpec((n_tile, n_tile), lambda i, k: (i, k)),
                      pl.BlockSpec((np_, fp), lambda i, k: (0, 0)),
                      pl.BlockSpec((fp, hp), lambda i, k: (0, 0)),
                      pl.BlockSpec((1, hp), lambda i, k: (0, 0))],
            out_specs=pl.BlockSpec((n_tile, hp), lambda i, k: (i, 0)),
            scratch_shapes=[pltpu.VMEM((n_tile, hp), jnp.float32)]),
        compiler_params=pltpu.CompilerParams(
            dimension_semantics=("parallel", "arbitrary"),
            vmem_limit_bytes=vmem_limit),
        cost_estimate=pl.CostEstimate(flops=flops, transcendentals=0,
                                      bytes_accessed=bytes_accessed),
    )(a, x, w, b)


def link_predictor(zs, zd, w1s, w1d, b1, w2_row, b2, e_tile, vmem_cap):
    """Tiled over label edges; returns lane-dense [1, E_pad] f32 scores."""
    ep, hp = zs.shape
    need = (2 * 2 * e_tile * hp * 2          # zs, zd double-buffered
            + 2 * 2 * hp * hp * 2            # resident W1a, W1b
            + 2 * 2 * hp * 4                 # b1, w2 rows (f32)
            + 2 * e_tile * 4)                # output, double-buffered
    vmem_limit = int(min(max(2 * need, 16 * 1024 * 1024), vmem_cap))

    return pl.pallas_call(
        _link_predictor_kernel,
        out_shape=jax.ShapeDtypeStruct((1, ep), jnp.float32),
        grid_spec=pltpu.PrefetchScalarGridSpec(
            num_scalar_prefetch=0,
            grid=(ep // e_tile,),
            in_specs=[pl.BlockSpec((e_tile, hp), lambda i: (i, 0)),
                      pl.BlockSpec((e_tile, hp), lambda i: (i, 0)),
                      pl.BlockSpec((hp, hp), lambda i: (0, 0)),
                      pl.BlockSpec((hp, hp), lambda i: (0, 0)),
                      pl.BlockSpec((1, hp), lambda i: (0, 0)),
                      pl.BlockSpec((1, hp), lambda i: (0, 0)),
                      pl.BlockSpec((1, 1), lambda i: (0, 0),
                                   memory_space=pltpu.MemorySpace.SMEM)],
            out_specs=pl.BlockSpec((1, e_tile), lambda i: (0, i))),
        compiler_params=pltpu.CompilerParams(
            dimension_semantics=("parallel",),
            vmem_limit_bytes=vmem_limit),
    )(zs, zd, w1s, w1d, b1, w2_row, b2)


# ----------------------------------------------------------------------------
# Model wrapper (glue in plain JAX)
# ----------------------------------------------------------------------------
def init_params(key, in_dim, hidden_dim):
    k1, k2, k3, k4 = jax.random.split(key, 4)
    scale = 0.1
    return {
        # encoder
        "w1": scale * jax.random.normal(k1, (in_dim, hidden_dim), jnp.float32),
        "b1": jnp.zeros((1, hidden_dim), jnp.float32),
        "w2": scale * jax.random.normal(k2, (hidden_dim, hidden_dim), jnp.float32),
        "b2": jnp.zeros((1, hidden_dim), jnp.float32),
        # predictor
        "wp1": scale * jax.random.normal(k3, (2 * hidden_dim, hidden_dim), jnp.float32),
        "bp1": jnp.zeros((1, hidden_dim), jnp.float32),
        "wp2": scale * jax.random.normal(k4, (hidden_dim, 1), jnp.float32),
        "bp2": jnp.zeros((1, 1), jnp.float32),
    }


def supervised_link_model(params, x, edge_index, edge_attr, edge_label_index):
    """Forward pass matching SupervisedLinkModel.forward semantics."""
    n, f_in = x.shape
    hidden = params["w1"].shape[1]

    # padded / tiled geometry: lane dims -> multiples of 128 only (no tile
    # round-up blow-up); tiles chosen to divide the padded extent.
    fp = _round_up(f_in, 128)
    hp = _round_up(hidden, 128)
    np_ = _round_up(n, 128)

    vmem_cap = _vmem_cap_bytes()
    # v5e/v6e (128 MiB VMEM) take 1024-wide tiles; v7x (64 MiB) capped at 512.
    tile_cap = 1024 if vmem_cap > 64 * 1024 * 1024 else 512
    n_tile = _pick_tile(np_, tile_cap)

    # --- dense weighted adjacency, self loops folded into the scatter ---
    loops = jnp.arange(n, dtype=edge_index.dtype)
    src = jnp.concatenate([edge_index[0], loops])
    dst = jnp.concatenate([edge_index[1], loops])
    wts = jnp.concatenate([edge_attr[:, 0],
                           jnp.ones((n,), edge_attr.dtype)])
    a = jnp.zeros((n, n), jnp.float32).at[dst, src].add(wts)
    a = _pad2(a.astype(jnp.bfloat16), np_, np_)          # bf16 before padding

    x_p = _pad2(x.astype(jnp.bfloat16), np_, fp)
    w1 = _pad2(params["w1"].astype(jnp.bfloat16), fp, hp)
    b1 = _pad2(params["b1"], 1, hp)                      # f32 epilogue bias
    w2 = _pad2(params["w2"].astype(jnp.bfloat16), hp, hp)
    b2 = _pad2(params["b2"], 1, hp)

    # --- encoder (fused Pallas GCN layers; only A streamed from HBM) ---
    h = gcn_layer(a, x_p, w1, b1, n_tile, vmem_cap, apply_relu=True)   # [Np,Hp]
    z = gcn_layer(a, h, w2, b2, n_tile, vmem_cap, apply_relu=False)    # [Np,Hp]

    # --- predictor ---
    e = edge_label_index.shape[1]
    ep = _round_up(e, 128)
    e_tile = _pick_tile(ep, 2048)

    # TODO(synk): fuse this gather into the predictor (scalar-prefetched
    # indices + manual DMA row gather) to avoid the [E, Hp] round trips.
    z_src = jnp.take(z, edge_label_index[0], axis=0)
    z_dst = jnp.take(z, edge_label_index[1], axis=0)
    z_src = jnp.pad(z_src, ((0, ep - e), (0, 0)))
    z_dst = jnp.pad(z_dst, ((0, ep - e), (0, 0)))

    wp1 = params["wp1"]
    wp1_src = _pad2(wp1[:hidden].astype(jnp.bfloat16), hp, hp)
    wp1_dst = _pad2(wp1[hidden:].astype(jnp.bfloat16), hp, hp)
    bp1 = _pad2(params["bp1"], 1, hp)
    wp2_row = _pad2(params["wp2"].T, 1, hp)              # [1, Hp] f32
    bp2 = params["bp2"]                                  # [1, 1] f32 (SMEM)

    scores = link_predictor(z_src, z_dst, wp1_src, wp1_dst, bp1,
                            wp2_row, bp2, e_tile, vmem_cap)   # [1, Ep] f32
    return scores[0, :e]                                      # [E_lbl]


# ----------------------------------------------------------------------------
# Pure-JAX f32 reference for a sanity check
# ----------------------------------------------------------------------------
def reference_forward(params, x, edge_index, edge_attr, edge_label_index):
    n = x.shape[0]
    a = jnp.zeros((n, n), jnp.float32)
    a = a.at[edge_index[1], edge_index[0]].add(edge_attr[:, 0])
    a = a + jnp.eye(n, dtype=jnp.float32)
    h = jnp.maximum(a @ (x @ params["w1"]) + params["b1"], 0.0)
    z = a @ (h @ params["w2"]) + params["b2"]
    z_src = z[edge_label_index[0]]
    z_dst = z[edge_label_index[1]]
    pair = jnp.concatenate([z_src, z_dst], axis=-1)
    hp = jnp.maximum(pair @ params["wp1"] + params["bp1"], 0.0)
    return (hp @ params["wp2"] + params["bp2"])[:, 0]


# ----------------------------------------------------------------------------
if __name__ == "__main__":
    key = jax.random.PRNGKey(0)
    k_x, k_ei, k_ea, k_eli, k_p = jax.random.split(key, 5)

    N, IN_DIM, HIDDEN = 32, 16, 32
    E, E_LBL = 64, 8

    x = jax.random.normal(k_x, (N, IN_DIM), jnp.float32)
    edge_index = jax.random.randint(k_ei, (2, E), 0, N, dtype=jnp.int32)
    edge_attr = jax.random.uniform(k_ea, (E, 1), jnp.float32)
    edge_label_index = jax.random.randint(k_eli, (2, E_LBL), 0, N, dtype=jnp.int32)

    params = init_params(k_p, IN_DIM, HIDDEN)

    fwd = jax.jit(supervised_link_model)
    out = jax.block_until_ready(
        fwd(params, x, edge_index, edge_attr, edge_label_index))

    ref = reference_forward(params, x, edge_index, edge_attr, edge_label_index)
    assert out.shape == (E_LBL,)
    # bf16 matmul operands (f32 accumulation) vs f32 reference -> loose tolerance
    assert jnp.allclose(out, ref, atol=5e-2, rtol=5e-2), (out, ref)

    print("KERNEL_OK")
</pallas_src>

<mosaic_0001>
module attributes {stable_mosaic.version = 11 : i64} {
  func.func private @main(%arg0: i32) attributes {dimension_semantics = [#tpu.dimension_semantics<core_parallel>], iteration_bounds = array<i64: 2>, tpu.core_type = #tpu.core_type<sc_scalar_subcore>, window_params = []} {
    return
  }
}

module attributes {stable_mosaic.version = 11 : i64} {
  func.func private @main(%arg0: i32) attributes {dimension_semantics = [#tpu.dimension_semantics<core_parallel>], iteration_bounds = array<i64: 2>, tpu.core_type = #tpu.core_type<sc_scalar_subcore>, window_params = []} {
    return
  }
}

module attributes {stable_mosaic.version = 11 : i64} {
  func.func @_gcn_fused_kernel(%arg0: i32, %arg1: i32, %arg2: memref<128x128xbf16, #tpu.memory_space<vmem>>, %arg3: memref<128x128xbf16, #tpu.memory_space<vmem>>, %arg4: memref<128x128xbf16, #tpu.memory_space<vmem>>, %arg5: memref<1x128xf32, #tpu.memory_space<vmem>>, %arg6: memref<128x128xbf16, #tpu.memory_space<vmem>>, %arg7: memref<128x128xf32, #tpu.memory_space<vmem>>) attributes {dimension_semantics = [#tpu.dimension_semantics<parallel>, #tpu.dimension_semantics<arbitrary>], iteration_bounds = array<i64: 1, 1>, scalar_prefetch = 0 : i64, scratch_operands = 1 : i64, tpu.core_type = #tpu.core_type<tc>, window_params = [{transform_indices = @transform_0, window_bounds = array<i64: 128, 128>}, {pipeline_mode = #tpu.pipeline_mode<synchronous>, transform_indices = @transform_1, window_bounds = array<i64: 128, 128>}, {pipeline_mode = #tpu.pipeline_mode<synchronous>, transform_indices = @transform_2, window_bounds = array<i64: 128, 128>}, {pipeline_mode = #tpu.pipeline_mode<synchronous>, transform_indices = @transform_3, window_bounds = array<i64: 1, 128>}, {transform_indices = @transform_4, window_bounds = array<i64: 128, 128>}]} {
    %c0_i32 = arith.constant 0 : i32
    %0 = arith.cmpi eq, %arg1, %c0_i32 : i32
    %1 = arith.extui %0 : i1 to i32
    %c0_i32_0 = arith.constant 0 : i32
    %2 = arith.cmpi ne, %1, %c0_i32_0 : i32
    scf.if %2 {
      %cst_12 = arith.constant 0.000000e+00 : f32
      %18 = vector.broadcast %cst_12 : f32 to vector<128x128xf32>
      %c0_13 = arith.constant 0 : index
      %c0_14 = arith.constant 0 : index
      %19 = vector.load %arg7[%c0_13, %c0_14] : memref<128x128xf32, #tpu.memory_space<vmem>>, vector<128x128xf32>
      tpu.vector_store %arg7[%c0_13, %c0_14], %18 {strides = array<i32>} : memref<128x128xf32, #tpu.memory_space<vmem>>, vector<128x128xf32>,
    } else {
    }
    %c128_i32 = arith.constant 128 : i32
    %3 = arith.muli %arg1, %c128_i32 : i32
    %4 = tpu.assume_multiple %3, 128 : i32
    %5 = arith.index_cast %4 : i32 to index
    %c0 = arith.constant 0 : index
    %6 = vector.load %arg3[%5, %c0] : memref<128x128xbf16, #tpu.memory_space<vmem>>, vector<128x128xbf16>
    %c0_1 = arith.constant 0 : index
    %c0_2 = arith.constant 0 : index
    %7 = vector.load %arg4[%c0_1, %c0_2] : memref<128x128xbf16, #tpu.memory_space<vmem>>, vector<128x128xbf16>
    %cst = arith.constant dense<0.000000e+00> : vector<128x128xf32>
    %8 = tpu.matmul %6, %7, %cst {dimension_numbers = #tpu.dot_dimension_numbers<[1], [0], [0], [1], [0, 0, 1, 1], [], []>} : vector<128x128xbf16>, vector<128x128xbf16>, vector<128x128xf32> -> vector<128x128xf32>
    %9 = arith.truncf %8 : vector<128x128xf32> to vector<128x128xbf16>
    %c0_3 = arith.constant 0 : index
    %c0_4 = arith.constant 0 : index
    %10 = vector.load %arg7[%c0_3, %c0_4] : memref<128x128xf32, #tpu.memory_space<vmem>>, vector<128x128xf32>
    %c0_5 = arith.constant 0 : index
    %c0_6 = arith.constant 0 : index
    %11 = vector.load %arg2[%c0_5, %c0_6] : memref<128x128xbf16, #tpu.memory_space<vmem>>, vector<128x128xbf16>
    %cst_7 = arith.constant dense<0.000000e+00> : vector<128x128xf32>
    %12 = tpu.matmul %11, %9, %cst_7 {dimension_numbers = #tpu.dot_dimension_numbers<[1], [0], [0], [1], [0, 0, 1, 1], [], []>} : vector<128x128xbf16>, vector<128x128xbf16>, vector<128x128xf32> -> vector<128x128xf32>
    %13 = arith.addf %10, %12 : vector<128x128xf32>
    %c0_8 = arith.constant 0 : index
    %c0_9 = arith.constant 0 : index
    %14 = vector.load %arg7[%c0_8, %c0_9] : memref<128x128xf32, #tpu.memory_space<vmem>>, vector<128x128xf32>
    tpu.vector_store %arg7[%c0_8, %c0_9], %13 {strides = array<i32>} : memref<128x128xf32, #tpu.memory_space<vmem>>, vector<128x128xf32>,
    %c0_i32_10 = arith.constant 0 : i32
    %15 = arith.cmpi eq, %arg1, %c0_i32_10 : i32
    %16 = arith.extui %15 : i1 to i32
    %c0_i32_11 = arith.constant 0 : i32
    %17 = arith.cmpi ne, %16, %c0_i32_11 : i32
    scf.if %17 {
      %c0_12 = arith.constant 0 : index
      %c0_13 = arith.constant 0 : index
      %18 = vector.load %arg7[%c0_12, %c0_13] : memref<128x128xf32, #tpu.memory_space<vmem>>, vector<128x128xf32>
      %c0_14 = arith.constant 0 : index
      %c0_15 = arith.constant 0 : index
      %19 = vector.load %arg5[%c0_14, %c0_15] : memref<1x128xf32, #tpu.memory_space<vmem>>, vector<1x128xf32>
      %20 = vector.broadcast %19 : vector<1x128xf32> to vector<128x128xf32>
      %21 = arith.addf %18, %20 : vector<128x128xf32>
      %cst_16 = arith.constant 0.000000e+00 : f32
      %22 = vector.broadcast %cst_16 : f32 to vector<128x128xf32>
      %23 = arith.maximumf %21, %22 : vector<128x128xf32>
      %24 = arith.truncf %23 : vector<128x128xf32> to vector<128x128xbf16>
      %c0_17 = arith.constant 0 : index
      %c0_18 = arith.constant 0 : index
      %25 = vector.load %arg6[%c0_17, %c0_18] : memref<128x128xbf16, #tpu.memory_space<vmem>>, vector<128x128xbf16>
      tpu.vector_store %arg6[%c0_17, %c0_18], %24 {strides = array<i32>} : memref<128x128xbf16, #tpu.memory_space<vmem>>, vector<128x128xbf16>,
    } else {
    }
    return
  }
  func.func @transform_0(%arg0: i32, %arg1: i32) -> (i32, i32) {
    %c0_i32 = arith.constant 0 : i32
    return %arg0, %arg1 : i32, i32
  }
  func.func @transform_1(%arg0: i32, %arg1: i32) -> (i32, i32) {
    %c0_i32 = arith.constant 0 : i32
    %c0_i32_0 = arith.constant 0 : i32
    %c0_i32_1 = arith.constant 0 : i32
    return %c0_i32, %c0_i32_0 : i32, i32
  }
  func.func @transform_2(%arg0: i32, %arg1: i32) -> (i32, i32) {
    %c0_i32 = arith.constant 0 : i32
    %c0_i32_0 = arith.constant 0 : i32
    %c0_i32_1 = arith.constant 0 : i32
    return %c0_i32, %c0_i32_0 : i32, i32
  }
  func.func @transform_3(%arg0: i32, %arg1: i32) -> (i32, i32) {
    %c0_i32 = arith.constant 0 : i32
    %c0_i32_0 = arith.constant 0 : i32
    %c0_i32_1 = arith.constant 0 : i32
    return %c0_i32, %c0_i32_0 : i32, i32
  }
  func.func @transform_4(%arg0: i32, %arg1: i32) -> (i32, i32) {
    %c0_i32 = arith.constant 0 : i32
    %c0_i32_0 = arith.constant 0 : i32
    return %arg0, %c0_i32 : i32, i32
  }
}

module attributes {stable_mosaic.version = 11 : i64} {
  func.func @_gcn_fused_kernel(%arg0: i32, %arg1: i32, %arg2: memref<128x128xbf16, #tpu.memory_space<vmem>>, %arg3: memref<128x128xbf16, #tpu.memory_space<vmem>>, %arg4: memref<128x128xbf16, #tpu.memory_space<vmem>>, %arg5: memref<1x128xf32, #tpu.memory_space<vmem>>, %arg6: memref<128x128xbf16, #tpu.memory_space<vmem>>, %arg7: memref<128x128xf32, #tpu.memory_space<vmem>>) attributes {dimension_semantics = [#tpu.dimension_semantics<parallel>, #tpu.dimension_semantics<arbitrary>], iteration_bounds = array<i64: 1, 1>, scalar_prefetch = 0 : i64, scratch_operands = 1 : i64, tpu.core_type = #tpu.core_type<tc>, window_params = [{transform_indices = @transform_0, window_bounds = array<i64: 128, 128>}, {pipeline_mode = #tpu.pipeline_mode<synchronous>, transform_indices = @transform_1, window_bounds = array<i64: 128, 128>}, {pipeline_mode = #tpu.pipeline_mode<synchronous>, transform_indices = @transform_2, window_bounds = array<i64: 128, 128>}, {pipeline_mode = #tpu.pipeline_mode<synchronous>, transform_indices = @transform_3, window_bounds = array<i64: 1, 128>}, {transform_indices = @transform_4, window_bounds = array<i64: 128, 128>}]} {
    %c0_i32 = arith.constant 0 : i32
    %0 = arith.cmpi eq, %arg1, %c0_i32 : i32
    %1 = arith.extui %0 : i1 to i32
    %c0_i32_0 = arith.constant 0 : i32
    %2 = arith.cmpi ne, %1, %c0_i32_0 : i32
    scf.if %2 {
      %cst_12 = arith.constant 0.000000e+00 : f32
      %18 = vector.broadcast %cst_12 : f32 to vector<128x128xf32>
      %c0_13 = arith.constant 0 : index
      %c0_14 = arith.constant 0 : index
      %19 = vector.load %arg7[%c0_13, %c0_14] : memref<128x128xf32, #tpu.memory_space<vmem>>, vector<128x128xf32>
      tpu.vector_store %arg7[%c0_13, %c0_14], %18 {strides = array<i32>} : memref<128x128xf32, #tpu.memory_space<vmem>>, vector<128x128xf32>,
    } else {
    }
    %c128_i32 = arith.constant 128 : i32
    %3 = arith.muli %arg1, %c128_i32 : i32
    %4 = tpu.assume_multiple %3, 128 : i32
    %5 = arith.index_cast %4 : i32 to index
    %c0 = arith.constant 0 : index
    %6 = vector.load %arg3[%5, %c0] : memref<128x128xbf16, #tpu.memory_space<vmem>>, vector<128x128xbf16>
    %c0_1 = arith.constant 0 : index
    %c0_2 = arith.constant 0 : index
    %7 = vector.load %arg4[%c0_1, %c0_2] : memref<128x128xbf16, #tpu.memory_space<vmem>>, vector<128x128xbf16>
    %cst = arith.constant dense<0.000000e+00> : vector<128x128xf32>
    %8 = tpu.matmul %6, %7, %cst {dimension_numbers = #tpu.dot_dimension_numbers<[1], [0], [0], [1], [0, 0, 1, 1], [], []>} : vector<128x128xbf16>, vector<128x128xbf16>, vector<128x128xf32> -> vector<128x128xf32>
    %9 = arith.truncf %8 : vector<128x128xf32> to vector<128x128xbf16>
    %c0_3 = arith.constant 0 : index
    %c0_4 = arith.constant 0 : index
    %10 = vector.load %arg7[%c0_3, %c0_4] : memref<128x128xf32, #tpu.memory_space<vmem>>, vector<128x128xf32>
    %c0_5 = arith.constant 0 : index
    %c0_6 = arith.constant 0 : index
    %11 = vector.load %arg2[%c0_5, %c0_6] : memref<128x128xbf16, #tpu.memory_space<vmem>>, vector<128x128xbf16>
    %cst_7 = arith.constant dense<0.000000e+00> : vector<128x128xf32>
    %12 = tpu.matmul %11, %9, %cst_7 {dimension_numbers = #tpu.dot_dimension_numbers<[1], [0], [0], [1], [0, 0, 1, 1], [], []>} : vector<128x128xbf16>, vector<128x128xbf16>, vector<128x128xf32> -> vector<128x128xf32>
    %13 = arith.addf %10, %12 : vector<128x128xf32>
    %c0_8 = arith.constant 0 : index
    %c0_9 = arith.constant 0 : index
    %14 = vector.load %arg7[%c0_8, %c0_9] : memref<128x128xf32, #tpu.memory_space<vmem>>, vector<128x128xf32>
    tpu.vector_store %arg7[%c0_8, %c0_9], %13 {strides = array<i32>} : memref<128x128xf32, #tpu.memory_space<vmem>>, vector<128x128xf32>,
    %c0_i32_10 = arith.constant 0 : i32
    %15 = arith.cmpi eq, %arg1, %c0_i32_10 : i32
    %16 = arith.extui %15 : i1 to i32
    %c0_i32_11 = arith.constant 0 : i32
    %17 = arith.cmpi ne, %16, %c0_i32_11 : i32
    scf.if %17 {
      %c0_12 = arith.constant 0 : index
      %c0_13 = arith.constant 0 : index
      %18 = vector.load %arg7[%c0_12, %c0_13] : memref<128x128xf32, #tpu.memory_space<vmem>>, vector<128x128xf32>
      %c0_14 = arith.constant 0 : index
      %c0_15 = arith.constant 0 : index
      %19 = vector.load %arg5[%c0_14, %c0_15] : memref<1x128xf32, #tpu.memory_space<vmem>>, vector<1x128xf32>
      %20 = vector.broadcast %19 : vector<1x128xf32> to vector<128x128xf32>
      %21 = arith.addf %18, %20 : vector<128x128xf32>
      %22 = arith.truncf %21 : vector<128x128xf32> to vector<128x128xbf16>
      %c0_16 = arith.constant 0 : index
      %c0_17 = arith.constant 0 : index
      %23 = vector.load %arg6[%c0_16, %c0_17] : memref<128x128xbf16, #tpu.memory_space<vmem>>, vector<128x128xbf16>
      tpu.vector_store %arg6[%c0_16, %c0_17], %22 {strides = array<i32>} : memref<128x128xbf16, #tpu.memory_space<vmem>>, vector<128x128xbf16>,
    } else {
    }
    return
  }
  func.func @transform_0(%arg0: i32, %arg1: i32) -> (i32, i32) {
    %c0_i32 = arith.constant 0 : i32
    return %arg0, %arg1 : i32, i32
  }
  func.func @transform_1(%arg0: i32, %arg1: i32) -> (i32, i32) {
    %c0_i32 = arith.constant 0 : i32
    %c0_i32_0 = arith.constant 0 : i32
    %c0_i32_1 = arith.constant 0 : i32
    return %c0_i32, %c0_i32_0 : i32, i32
  }
  func.func @transform_2(%arg0: i32, %arg1: i32) -> (i32, i32) {
    %c0_i32 = arith.constant 0 : i32
    %c0_i32_0 = arith.constant 0 : i32
    %c0_i32_1 = arith.constant 0 : i32
    return %c0_i32, %c0_i32_0 : i32, i32
  }
  func.func @transform_3(%arg0: i32, %arg1: i32) -> (i32, i32) {
    %c0_i32 = arith.constant 0 : i32
    %c0_i32_0 = arith.constant 0 : i32
    %c0_i32_1 = arith.constant 0 : i32
    return %c0_i32, %c0_i32_0 : i32, i32
  }
  func.func @transform_4(%arg0: i32, %arg1: i32) -> (i32, i32) {
    %c0_i32 = arith.constant 0 : i32
    %c0_i32_0 = arith.constant 0 : i32
    return %arg0, %c0_i32 : i32, i32
  }
}

module attributes {stable_mosaic.version = 11 : i64} {
  func.func @_link_predictor_kernel(%arg0: i32, %arg1: memref<128x128xbf16, #tpu.memory_space<vmem>>, %arg2: memref<128x128xbf16, #tpu.memory_space<vmem>>, %arg3: memref<128x128xbf16, #tpu.memory_space<vmem>>, %arg4: memref<128x128xbf16, #tpu.memory_space<vmem>>, %arg5: memref<1x128xf32, #tpu.memory_space<vmem>>, %arg6: memref<1x128xf32, #tpu.memory_space<vmem>>, %arg7: memref<1x1xf32, #tpu.memory_space<smem>>, %arg8: memref<1x128xf32, #tpu.memory_space<vmem>>) attributes {dimension_semantics = [#tpu.dimension_semantics<parallel>], iteration_bounds = array<i64: 1>, scalar_prefetch = 0 : i64, scratch_operands = 0 : i64, tpu.core_type = #tpu.core_type<tc>, window_params = [{transform_indices = @transform_0, window_bounds = array<i64: 128, 128>}, {transform_indices = @transform_1, window_bounds = array<i64: 128, 128>}, {pipeline_mode = #tpu.pipeline_mode<synchronous>, transform_indices = @transform_2, window_bounds = array<i64: 128, 128>}, {pipeline_mode = #tpu.pipeline_mode<synchronous>, transform_indices = @transform_3, window_bounds = array<i64: 128, 128>}, {pipeline_mode = #tpu.pipeline_mode<synchronous>, transform_indices = @transform_4, window_bounds = array<i64: 1, 128>}, {pipeline_mode = #tpu.pipeline_mode<synchronous>, transform_indices = @transform_5, window_bounds = array<i64: 1, 128>}, {transform_indices = @transform_6, window_bounds = array<i64: 1, 1>}, {transform_indices = @transform_7, window_bounds = array<i64: 1, 128>}]} {
    %c0 = arith.constant 0 : index
    %c0_0 = arith.constant 0 : index
    %0 = vector.load %arg1[%c0, %c0_0] : memref<128x128xbf16, #tpu.memory_space<vmem>>, vector<128x128xbf16>
    %c0_1 = arith.constant 0 : index
    %c0_2 = arith.constant 0 : index
    %1 = vector.load %arg3[%c0_1, %c0_2] : memref<128x128xbf16, #tpu.memory_space<vmem>>, vector<128x128xbf16>
    %cst = arith.constant dense<0.000000e+00> : vector<128x128xf32>
    %2 = tpu.matmul %0, %1, %cst {dimension_numbers = #tpu.dot_dimension_numbers<[1], [0], [0], [1], [0, 0, 1, 1], [], []>} : vector<128x128xbf16>, vector<128x128xbf16>, vector<128x128xf32> -> vector<128x128xf32>
    %c0_3 = arith.constant 0 : index
    %c0_4 = arith.constant 0 : index
    %3 = vector.load %arg2[%c0_3, %c0_4] : memref<128x128xbf16, #tpu.memory_space<vmem>>, vector<128x128xbf16>
    %c0_5 = arith.constant 0 : index
    %c0_6 = arith.constant 0 : index
    %4 = vector.load %arg4[%c0_5, %c0_6] : memref<128x128xbf16, #tpu.memory_space<vmem>>, vector<128x128xbf16>
    %cst_7 = arith.constant dense<0.000000e+00> : vector<128x128xf32>
    %5 = tpu.matmul %3, %4, %cst_7 {dimension_numbers = #tpu.dot_dimension_numbers<[1], [0], [0], [1], [0, 0, 1, 1], [], []>} : vector<128x128xbf16>, vector<128x128xbf16>, vector<128x128xf32> -> vector<128x128xf32>
    %6 = arith.addf %2, %5 : vector<128x128xf32>
    %c0_8 = arith.constant 0 : index
    %c0_9 = arith.constant 0 : index
    %7 = vector.load %arg5[%c0_8, %c0_9] : memref<1x128xf32, #tpu.memory_space<vmem>>, vector<1x128xf32>
    %8 = vector.broadcast %7 : vector<1x128xf32> to vector<128x128xf32>
    %9 = arith.addf %6, %8 : vector<128x128xf32>
    %cst_10 = arith.constant 0.000000e+00 : f32
    %10 = vector.broadcast %cst_10 : f32 to vector<128x128xf32>
    %11 = arith.maximumf %9, %10 : vector<128x128xf32>
    %c0_11 = arith.constant 0 : index
    %c0_12 = arith.constant 0 : index
    %12 = vector.load %arg6[%c0_11, %c0_12] : memref<1x128xf32, #tpu.memory_space<vmem>>, vector<1x128xf32>
    %13 = vector.broadcast %12 : vector<1x128xf32> to vector<128x128xf32>
    %14 = arith.mulf %11, %13 : vector<128x128xf32>
    %cst_13 = arith.constant dense<0.000000e+00> : vector<128xf32>
    %15 = vector.multi_reduction <add>, %14, %cst_13 [1] : vector<128x128xf32> to vector<128xf32>
    %c0_14 = arith.constant 0 : index
    %c0_15 = arith.constant 0 : index
    %16 = memref.load %arg7[%c0_14, %c0_15] : memref<1x1xf32, #tpu.memory_space<smem>>
    %17 = vector.broadcast %16 : f32 to vector<128xf32>
    %18 = arith.addf %15, %17 : vector<128xf32>
    %19 = vector.shape_cast %18 : vector<128xf32> to vector<1x128xf32>
    %c0_16 = arith.constant 0 : index
    %c0_17 = arith.constant 0 : index
    %20 = vector.load %arg8[%c0_16, %c0_17] : memref<1x128xf32, #tpu.memory_space<vmem>>, vector<1x128xf32>
    tpu.vector_store %arg8[%c0_16, %c0_17], %19 {strides = array<i32>} : memref<1x128xf32, #tpu.memory_space<vmem>>, vector<1x128xf32>,
    return
  }
  func.func @transform_0(%arg0: i32) -> (i32, i32) {
    %c0_i32 = arith.constant 0 : i32
    %c0_i32_0 = arith.constant 0 : i32
    return %arg0, %c0_i32 : i32, i32
  }
  func.func @transform_1(%arg0: i32) -> (i32, i32) {
    %c0_i32 = arith.constant 0 : i32
    %c0_i32_0 = arith.constant 0 : i32
    return %arg0, %c0_i32 : i32, i32
  }
  func.func @transform_2(%arg0: i32) -> (i32, i32) {
    %c0_i32 = arith.constant 0 : i32
    %c0_i32_0 = arith.constant 0 : i32
    %c0_i32_1 = arith.constant 0 : i32
    return %c0_i32, %c0_i32_0 : i32, i32
  }
  func.func @transform_3(%arg0: i32) -> (i32, i32) {
    %c0_i32 = arith.constant 0 : i32
    %c0_i32_0 = arith.constant 0 : i32
    %c0_i32_1 = arith.constant 0 : i32
    return %c0_i32, %c0_i32_0 : i32, i32
  }
  func.func @transform_4(%arg0: i32) -> (i32, i32) {
    %c0_i32 = arith.constant 0 : i32
    %c0_i32_0 = arith.constant 0 : i32
    %c0_i32_1 = arith.constant 0 : i32
    return %c0_i32, %c0_i32_0 : i32, i32
  }
  func.func @transform_5(%arg0: i32) -> (i32, i32) {
    %c0_i32 = arith.constant 0 : i32
    %c0_i32_0 = arith.constant 0 : i32
    %c0_i32_1 = arith.constant 0 : i32
    return %c0_i32, %c0_i32_0 : i32, i32
  }
  func.func @transform_6(%arg0: i32) -> (i32, i32) {
    %c0_i32 = arith.constant 0 : i32
    %c0_i32_0 = arith.constant 0 : i32
    %c0_i32_1 = arith.constant 0 : i32
    return %c0_i32, %c0_i32_0 : i32, i32
  }
  func.func @transform_7(%arg0: i32) -> (i32, i32) {
    %c0_i32 = arith.constant 0 : i32
    %c0_i32_0 = arith.constant 0 : i32
    return %c0_i32, %arg0 : i32, i32
  }
}

</mosaic_0001>

<llo_original>
// kernel: supervised_link_model.4
$region0: #{supervised_link_model.4}
  #allocation0 [shape = 'u32[]', space=smem, size = 0x4, offset = 0x4, fixed_abs, tag = 'smem constant byte address 0x4 - core index']
  #allocation1 [shape = 'u32[144,128]{1,0:T(1,128)}', space=vmem, size = 0x12000, scoped, tag = 'internal scratch']
  #allocation2 [shape = 'f32[128,128]{1,0:T(8,128)}', space=vmem, size = 0x10000, scoped, tag = 'scratch operand']
  %s0 = inlined_call_operand.vmem [shape: bf16[128,128], index: 0, kind: input, shape index: {}]
  %s1 = inlined_call_operand.vmem [shape: bf16[128,128], index: 1, kind: input, shape index: {}]
  %s2 = inlined_call_operand.vmem [shape: bf16[128,128], index: 2, kind: input, shape index: {}]
  %s3 = inlined_call_operand.vmem [shape: f32[1,128], index: 3, kind: input, shape index: {}]
  %s4 = inlined_call_operand.vmem [shape: bf16[128,128], index: 4, kind: output, shape index: {}]
  %s5 = sld [smem:[#allocation0]]
  $region34: #{supervised_link_model.4} parent=0
    _
  %s7 = ssub.s32 1, %s5
  %s8 = scalar_select 0, %s7, %s5
  // Predicated region
  $region2: #{supervised_link_model.4} parent=0 // pred_check
    _
  $region3: #{supervised_link_model.4} parent=0 // pred_check_branch
    %10 = sbr.rel (0) target = $region5
  $region4: #{supervised_link_model.4} parent=0 // pred_region
    _
  $region5: #{supervised_link_model.4} parent=0 // pred_fallthru
    _
  // Predicated region
  $region6: #{supervised_link_model.4} parent=0 // pred_check
    _
  $region7: #{supervised_link_model.4} parent=0 // pred_check_branch
    %12 = sbr.rel (0) target = $region9
  $region8: #{supervised_link_model.4} parent=0 // pred_region
    _
  $region9: #{supervised_link_model.4} parent=0 // pred_fallthru
    _
  // Predicated region
  $region10: #{supervised_link_model.4} parent=0 // pred_check
    _
  $region11: #{supervised_link_model.4} parent=0 // pred_check_branch
    %14 = sbr.rel (0) target = $region13
  $region12: #{supervised_link_model.4} parent=0 // pred_region
    _
  $region13: #{supervised_link_model.4} parent=0 // pred_fallthru
    _
  // Predicated region
  $region14: #{supervised_link_model.4} parent=0 // pred_check
    _
  $region15: #{supervised_link_model.4} parent=0 // pred_check_branch
    %16 = sbr.rel (0) target = $region17
  $region16: #{supervised_link_model.4} parent=0 // pred_region
    _
  $region17: #{supervised_link_model.4} parent=0 // pred_fallthru
    _
  %p18 = scmp.eq.s32.totalorder 0, 0
  // Predicated region
  $region18: #{supervised_link_model.4} parent=0 // pred_check
    %p19 = pneg %p18
  $region19: #{supervised_link_model.4} parent=0 // pred_check_branch
    %21 = sbr.rel (%p19) target = $region21
  $region20: #{supervised_link_model.4} parent=0 // pred_region
    %22 = vst [vmem:[#allocation2] sm:$0xff] 0.0
    %23 = vst [vmem:[#allocation2 + $0x8] sm:$0xff] 0.0
    %24 = vst [vmem:[#allocation2 + $0x10] sm:$0xff] 0.0
    %25 = vst [vmem:[#allocation2 + $0x18] sm:$0xff] 0.0
    %26 = vst [vmem:[#allocation2 + $0x20] sm:$0xff] 0.0
    %27 = vst [vmem:[#allocation2 + $0x28] sm:$0xff] 0.0
    %28 = vst [vmem:[#allocation2 + $0x30] sm:$0xff] 0.0
    %29 = vst [vmem:[#allocation2 + $0x38] sm:$0xff] 0.0
    %30 = vst [vmem:[#allocation2 + $0x40] sm:$0xff] 0.0
    %31 = vst [vmem:[#allocation2 + $0x48] sm:$0xff] 0.0
    %32 = vst [vmem:[#allocation2 + $0x50] sm:$0xff] 0.0
    %33 = vst [vmem:[#allocation2 + $0x58] sm:$0xff] 0.0
    %34 = vst [vmem:[#allocation2 + $0x60] sm:$0xff] 0.0
    %35 = vst [vmem:[#allocation2 + $0x68] sm:$0xff] 0.0
    %36 = vst [vmem:[#allocation2 + $0x70] sm:$0xff] 0.0
    %37 = vst [vmem:[#allocation2 + $0x78] sm:$0xff] 0.0
  $region21: #{supervised_link_model.4} parent=0 // pred_fallthru
    _
  %s38 = smul.u32 0, 128
  %s39 = sshra.s32 %s38, 3
  %s40 = sand.u32 %s38, 7
  %s41 = smul.addr %s39, 4
  %s42 = scalar_lea.vmem %s1, %s41
  %v43 = vld [vmem:[%s42] sm:$0xf]
  %v44 = vld [vmem:[%s42 + $0x4] sm:$0xf]
  %v45 = vld [vmem:[%s42 + $0x8] sm:$0xf]
  %v46 = vld [vmem:[%s42 + $0xc] sm:$0xf]
  %v47 = vld [vmem:[%s42 + $0x10] sm:$0xf]
  %v48 = vld [vmem:[%s42 + $0x14] sm:$0xf]
  %v49 = vld [vmem:[%s42 + $0x18] sm:$0xf]
  %v50 = vld [vmem:[%s42 + $0x1c] sm:$0xf]
  %v51 = vld [vmem:[%s42 + $0x20] sm:$0xf]
  %v52 = vld [vmem:[%s42 + $0x24] sm:$0xf]
  %v53 = vld [vmem:[%s42 + $0x28] sm:$0xf]
  %v54 = vld [vmem:[%s42 + $0x2c] sm:$0xf]
  %v55 = vld [vmem:[%s42 + $0x30] sm:$0xf]
  %v56 = vld [vmem:[%s42 + $0x34] sm:$0xf]
  %v57 = vld [vmem:[%s42 + $0x38] sm:$0xf]
  %v58 = vld [vmem:[%s42 + $0x3c] sm:$0xf]
  %v59 = vld [vmem:[%s2] sm:$0xf]
  %v60 = vld [vmem:[%s2 + $0x4] sm:$0xf]
  %v61 = vld [vmem:[%s2 + $0x8] sm:$0xf]
  %v62 = vld [vmem:[%s2 + $0xc] sm:$0xf]
  %v63 = vld [vmem:[%s2 + $0x10] sm:$0xf]
  %v64 = vld [vmem:[%s2 + $0x14] sm:$0xf]
  %v65 = vld [vmem:[%s2 + $0x18] sm:$0xf]
  %v66 = vld [vmem:[%s2 + $0x1c] sm:$0xf]
  %v67 = vld [vmem:[%s2 + $0x20] sm:$0xf]
  %v68 = vld [vmem:[%s2 + $0x24] sm:$0xf]
  %v69 = vld [vmem:[%s2 + $0x28] sm:$0xf]
  %v70 = vld [vmem:[%s2 + $0x2c] sm:$0xf]
  %v71 = vld [vmem:[%s2 + $0x30] sm:$0xf]
  %v72 = vld [vmem:[%s2 + $0x34] sm:$0xf]
  %v73 = vld [vmem:[%s2 + $0x38] sm:$0xf]
  %v74 = vld [vmem:[%s2 + $0x3c] sm:$0xf]
  %v91 = vunpack.c.l.b16 %v43
  %v92 = vunpack.c.l.b16 %v44
  %v93 = vunpack.c.l.b16 %v45
  %v94 = vunpack.c.l.b16 %v46
  %v95 = vunpack.c.l.b16 %v47
  %v96 = vunpack.c.l.b16 %v48
  %v97 = vunpack.c.l.b16 %v49
  %v98 = vunpack.c.l.b16 %v50
  %v99 = vunpack.c.l.b16 %v51
  %v100 = vunpack.c.l.b16 %v52
  %v101 = vunpack.c.l.b16 %v53
  %v102 = vunpack.c.l.b16 %v54
  %v103 = vunpack.c.l.b16 %v55
  %v104 = vunpack.c.l.b16 %v56
  %v105 = vunpack.c.l.b16 %v57
  %v106 = vunpack.c.l.b16 %v58
  %v107 = vpack.c.b16 %v92, %v91
  %v108 = vpack.c.b16 %v94, %v93
  %v109 = vpack.c.b16 %v96, %v95
  %v110 = vpack.c.b16 %v98, %v97
  %v111 = vpack.c.b16 %v100, %v99
  %v112 = vpack.c.b16 %v102, %v101
  %v113 = vpack.c.b16 %v104, %v103
  %v114 = vpack.c.b16 %v106, %v105
  %v139 = vunpack.c.l.b16 %v59
  %v140 = vunpack.c.l.b16 %v60
  %v141 = vunpack.c.l.b16 %v61
  %v142 = vunpack.c.l.b16 %v62
  %v143 = vunpack.c.l.b16 %v63
  %v144 = vunpack.c.l.b16 %v64
  %v145 = vunpack.c.l.b16 %v65
  %v146 = vunpack.c.l.b16 %v66
  %v147 = vunpack.c.l.b16 %v67
  %v148 = vunpack.c.l.b16 %v68
  %v149 = vunpack.c.l.b16 %v69
  %v150 = vunpack.c.l.b16 %v70
  %v151 = vunpack.c.l.b16 %v71
  %v152 = vunpack.c.l.b16 %v72
  %v153 = vunpack.c.l.b16 %v73
  %v154 = vunpack.c.l.b16 %v74
  %v155 = vpack.c.b16 %v140, %v139
  %v156 = vpack.c.b16 %v142, %v141
  %v157 = vpack.c.b16 %v144, %v143
  %v158 = vpack.c.b16 %v146, %v145
  %v159 = vpack.c.b16 %v148, %v147
  %v160 = vpack.c.b16 %v150, %v149
  %v161 = vpack.c.b16 %v152, %v151
  %v162 = vpack.c.b16 %v154, %v153
  %171 = vmatprep.subr.bf16.mxu0 0
  %172 = vmatpush1.bf16.msra.mxu0 %v162
  %173 = vmatprep.subr.bf16.mxu0 0
  %174 = vmatpush1.bf16.msra.mxu0 %v161
  %175 = vmatprep.subr.bf16.mxu0 0
  %176 = vmatpush1.bf16.msra.mxu0 %v160
  %177 = vmatprep.subr.bf16.mxu0 0
  %178 = vmatpush1.bf16.msra.mxu0 %v159
  %179 = vmatprep.subr.bf16.mxu0 0
  %180 = vmatpush1.bf16.msra.mxu0 %v158
  %181 = vmatprep.subr.bf16.mxu0 0
  %182 = vmatpush1.bf16.msra.mxu0 %v157
  %183 = vmatprep.subr.bf16.mxu0 0
  %184 = vmatpush1.bf16.msra.mxu0 %v156
  %185 = vmatprep.subr.bf16.mxu0 0
  %186 = vmatpush1.bf16.msra.mxu0 %v155
  %187 = vmatprep.subr.bf16.mxu0 0
  %188 = vmatpush2.bf16.msra.mxu0 0
  %189 = vmatprep.subr.bf16.mxu0 0
  %190 = vmatpush2.bf16.msra.mxu0 0
  %191 = vmatprep.subr.bf16.mxu0 0
  %192 = vmatpush2.bf16.msra.mxu0 0
  %193 = vmatprep.subr.bf16.mxu0 0
  %194 = vmatpush2.bf16.msra.mxu0 0
  %195 = vmatprep.subr.bf16.mxu0 0
  %196 = vmatpush2.bf16.msra.mxu0 0
  %197 = vmatprep.subr.bf16.mxu0 0
  %198 = vmatpush2.bf16.msra.mxu0 0
  %199 = vmatprep.subr.bf16.mxu0 0
  %200 = vmatpush2.bf16.msra.mxu0 0
  %201 = vmatprep.subr.bf16.mxu0 0
  %202 = vmatpush2.bf16.msra.mxu0 0
  %203 = vmatprep.mubr.bf16.mxu0 0
  %204 = vmatmul.mubr.bf16.gmra.mxu0 %v107
  %v205 = vpop.f32.mrf.mxu0
  %v206 = vadd.f32 0.0, %v205
  %v207 = vpop.f32.mrf.mxu0
  %v208 = vpop.f32.mrf.mxu0
  %v209 = vadd.f32 0.0, %v208
  %v210 = vpop.f32.mrf.mxu0
  %211 = vmatprep.mubr.bf16.mxu0 0
  %212 = vmatmul.mubr.bf16.gmra.mxu0 %v108
  %v213 = vpop.f32.mrf.mxu0
  %v214 = vadd.f32 0.0, %v213
  %v215 = vpop.f32.mrf.mxu0
  %v216 = vpop.f32.mrf.mxu0
  %v217 = vadd.f32 0.0, %v216
  %v218 = vpop.f32.mrf.mxu0
  %219 = vmatprep.mubr.bf16.mxu0 0
  %220 = vmatmul.mubr.bf16.gmra.mxu0 %v109
  %v221 = vpop.f32.mrf.mxu0
  %v222 = vadd.f32 0.0, %v221
  %v223 = vpop.f32.mrf.mxu0
  %v224 = vpop.f32.mrf.mxu0
  %v225 = vadd.f32 0.0, %v224
  %v226 = vpop.f32.mrf.mxu0
  %227 = vmatprep.mubr.bf16.mxu0 0
  %228 = vmatmul.mubr.bf16.gmra.mxu0 %v110
  %v229 = vpop.f32.mrf.mxu0
  %v230 = vadd.f32 0.0, %v229
  %v231 = vpop.f32.mrf.mxu0
  %v232 = vpop.f32.mrf.mxu0
  %v233 = vadd.f32 0.0, %v232
  %v234 = vpop.f32.mrf.mxu0
  %235 = vmatprep.mubr.bf16.mxu0 0
  %236 = vmatmul.mubr.bf16.gmra.mxu0 %v111
  %v237 = vpop.f32.mrf.mxu0
  %v238 = vadd.f32 0.0, %v237
  %v239 = vpop.f32.mrf.mxu0
  %v240 = vpop.f32.mrf.mxu0
  %v241 = vadd.f32 0.0, %v240
  %v242 = vpop.f32.mrf.mxu0
  %243 = vmatprep.mubr.bf16.mxu0 0
  %244 = vmatmul.mubr.bf16.gmra.mxu0 %v112
  %v245 = vpop.f32.mrf.mxu0
  %v246 = vadd.f32 0.0, %v245
  %v247 = vpop.f32.mrf.mxu0
  %v248 = vpop.f32.mrf.mxu0
  %v249 = vadd.f32 0.0, %v248
  %v250 = vpop.f32.mrf.mxu0
  %251 = vmatprep.mubr.bf16.mxu0 0
  %252 = vmatmul.mubr.bf16.gmra.mxu0 %v113
  %v253 = vpop.f32.mrf.mxu0
  %v254 = vadd.f32 0.0, %v253
  %v255 = vpop.f32.mrf.mxu0
  %v256 = vpop.f32.mrf.mxu0
  %v257 = vadd.f32 0.0, %v256
  %v258 = vpop.f32.mrf.mxu0
  %259 = vmatprep.mubr.bf16.mxu0 0
  %260 = vmatmul.mubr.bf16.gmra.mxu0 %v114
  %v261 = vpop.f32.mrf.mxu0
  %v262 = vadd.f32 0.0, %v261
  %v263 = vpop.f32.mrf.mxu0
  %v264 = vpop.f32.mrf.mxu0
  %v265 = vadd.f32 0.0, %v264
  %v266 = vpop.f32.mrf.mxu0
  %267 = vdwg.mxu0
  %v268 = vpack.c.bf16 %v209, %v206
  %v269 = vpack.c.bf16 %v217, %v214
  %v270 = vpack.c.bf16 %v225, %v222
  %v271 = vpack.c.bf16 %v233, %v230
  %v272 = vpack.c.bf16 %v241, %v238
  %v273 = vpack.c.bf16 %v249, %v246
  %v274 = vpack.c.bf16 %v257, %v254
  %v275 = vpack.c.bf16 %v265, %v262
  %v276 = vld [vmem:[#allocation2] sm:$0xff]
  %v277 = vld [vmem:[#allocation2 + $0x8] sm:$0xff]
  %v278 = vld [vmem:[#allocation2 + $0x10] sm:$0xff]
  %v279 = vld [vmem:[#allocation2 + $0x18] sm:$0xff]
  %v280 = vld [vmem:[#allocation2 + $0x20] sm:$0xff]
  %v281 = vld [vmem:[#allocation2 + $0x28] sm:$0xff]
  %v282 = vld [vmem:[#allocation2 + $0x30] sm:$0xff]
  %v283 = vld [vmem:[#allocation2 + $0x38] sm:$0xff]
  %v284 = vld [vmem:[#allocation2 + $0x40] sm:$0xff]
  %v285 = vld [vmem:[#allocation2 + $0x48] sm:$0xff]
  %v286 = vld [vmem:[#allocation2 + $0x50] sm:$0xff]
  %v287 = vld [vmem:[#allocation2 + $0x58] sm:$0xff]
  %v288 = vld [vmem:[#allocation2 + $0x60] sm:$0xff]
  %v289 = vld [vmem:[#allocation2 + $0x68] sm:$0xff]
  %v290 = vld [vmem:[#allocation2 + $0x70] sm:$0xff]
  %v291 = vld [vmem:[#allocation2 + $0x78] sm:$0xff]
  %v292 = vld [vmem:[%s0] sm:$0xf]
  %v293 = vld [vmem:[%s0 + $0x4] sm:$0xf]
  %v294 = vld [vmem:[%s0 + $0x8] sm:$0xf]
  %v295 = vld [vmem:[%s0 + $0xc] sm:$0xf]
  %v296 = vld [vmem:[%s0 + $0x10] sm:$0xf]
  %v297 = vld [vmem:[%s0 + $0x14] sm:$0xf]
  %v298 = vld [vmem:[%s0 + $0x18] sm:$0xf]
  %v299 = vld [vmem:[%s0 + $0x1c] sm:$0xf]
  %v300 = vld [vmem:[%s0 + $0x20] sm:$0xf]
  %v301 = vld [vmem:[%s0 + $0x24] sm:$0xf]
  %v302 = vld [vmem:[%s0 + $0x28] sm:$0xf]
  %v303 = vld [vmem:[%s0 + $0x2c] sm:$0xf]
  %v304 = vld [vmem:[%s0 + $0x30] sm:$0xf]
  %v305 = vld [vmem:[%s0 + $0x34] sm:$0xf]
  %v306 = vld [vmem:[%s0 + $0x38] sm:$0xf]
  %v307 = vld [vmem:[%s0 + $0x3c] sm:$0xf]
  %v324 = vunpack.c.l.b16 %v292
  %v325 = vunpack.c.l.b16 %v293
  %v326 = vunpack.c.l.b16 %v294
  %v327 = vunpack.c.l.b16 %v295
  %v328 = vunpack.c.l.b16 %v296
  %v329 = vunpack.c.l.b16 %v297
  %v330 = vunpack.c.l.b16 %v298
  %v331 = vunpack.c.l.b16 %v299
  %v332 = vunpack.c.l.b16 %v300
  %v333 = vunpack.c.l.b16 %v301
  %v334 = vunpack.c.l.b16 %v302
  %v335 = vunpack.c.l.b16 %v303
  %v336 = vunpack.c.l.b16 %v304
  %v337 = vunpack.c.l.b16 %v305
  %v338 = vunpack.c.l.b16 %v306
  %v339 = vunpack.c.l.b16 %v307
  %v340 = vpack.c.b16 %v325, %v324
  %v341 = vpack.c.b16 %v327, %v326
  %v342 = vpack.c.b16 %v329, %v328
  %v343 = vpack.c.b16 %v331, %v330
  %v344 = vpack.c.b16 %v333, %v332
  %v345 = vpack.c.b16 %v335, %v334
  %v346 = vpack.c.b16 %v337, %v336
  %v347 = vpack.c.b16 %v339, %v338
  %356 = vmatprep.subr.bf16.mxu0 0
  %357 = vmatpush1.bf16.msra.mxu0 %v275
  %358 = vmatprep.subr.bf16.mxu0 0
  %359 = vmatpush1.bf16.msra.mxu0 %v274
  %360 = vmatprep.subr.bf16.mxu0 0
  %361 = vmatpush1.bf16.msra.mxu0 %v273
  %362 = vmatprep.subr.bf16.mxu0 0
  %363 = vmatpush1.bf16.msra.mxu0 %v272
  %364 = vmatprep.subr.bf16.mxu0 0
  %365 = vmatpush1.bf16.msra.mxu0 %v271
  %366 = vmatprep.subr.bf16.mxu0 0
  %367 = vmatpush1.bf16.msra.mxu0 %v270
  %368 = vmatprep.subr.bf16.mxu0 0
  %369 = vmatpush1.bf16.msra.mxu0 %v269
  %370 = vmatprep.subr.bf16.mxu0 0
  %371 = vmatpush1.bf16.msra.mxu0 %v268
  %372 = vmatprep.subr.bf16.mxu0 0
  %373 = vmatpush2.bf16.msra.mxu0 0
  %374 = vmatprep.subr.bf16.mxu0 0
  %375 = vmatpush2.bf16.msra.mxu0 0
  %376 = vmatprep.subr.bf16.mxu0 0
  %377 = vmatpush2.bf16.msra.mxu0 0
  %378 = vmatprep.subr.bf16.mxu0 0
  %379 = vmatpush2.bf16.msra.mxu0 0
  %380 = vmatprep.subr.bf16.mxu0 0
  %381 = vmatpush2.bf16.msra.mxu0 0
  %382 = vmatprep.subr.bf16.mxu0 0
  %383 = vmatpush2.bf16.msra.mxu0 0
  %384 = vmatprep.subr.bf16.mxu0 0
  %385 = vmatpush2.bf16.msra.mxu0 0
  %386 = vmatprep.subr.bf16.mxu0 0
  %387 = vmatpush2.bf16.msra.mxu0 0
  %388 = vmatprep.mubr.bf16.mxu0 0
  %389 = vmatmul.mubr.bf16.gmra.mxu0 %v340
  %v390 = vpop.f32.mrf.mxu0
  %v391 = vadd.f32 0.0, %v390
  %v392 = vpop.f32.mrf.mxu0
  %v393 = vpop.f32.mrf.mxu0
  %v394 = vadd.f32 0.0, %v393
  %v395 = vpop.f32.mrf.mxu0
  %396 = vmatprep.mubr.bf16.mxu0 0
  %397 = vmatmul.mubr.bf16.gmra.mxu0 %v341
  %v398 = vpop.f32.mrf.mxu0
  %v399 = vadd.f32 0.0, %v398
  %v400 = vpop.f32.mrf.mxu0
  %v401 = vpop.f32.mrf.mxu0
  %v402 = vadd.f32 0.0, %v401
  %v403 = vpop.f32.mrf.mxu0
  %404 = vmatprep.mubr.bf16.mxu0 0
  %405 = vmatmul.mubr.bf16.gmra.mxu0 %v342
  %v406 = vpop.f32.mrf.mxu0
  %v407 = vadd.f32 0.0, %v406
  %v408 = vpop.f32.mrf.mxu0
  %v409 = vpop.f32.mrf.mxu0
  %v410 = vadd.f32 0.0, %v409
  %v411 = vpop.f32.mrf.mxu0
  %412 = vmatprep.mubr.bf16.mxu0 0
  %413 = vmatmul.mubr.bf16.gmra.mxu0 %v343
  %v414 = vpop.f32.mrf.mxu0
  %v415 = vadd.f32 0.0, %v414
  %v416 = vpop.f32.mrf.mxu0
  %v417 = vpop.f32.mrf.mxu0
  %v418 = vadd.f32 0.0, %v417
  %v419 = vpop.f32.mrf.mxu0
  %420 = vmatprep.mubr.bf16.mxu0 0
  %421 = vmatmul.mubr.bf16.gmra.mxu0 %v344
  %v422 = vpop.f32.mrf.mxu0
  %v423 = vadd.f32 0.0, %v422
  %v424 = vpop.f32.mrf.mxu0
  %v425 = vpop.f32.mrf.mxu0
  %v426 = vadd.f32 0.0, %v425
  %v427 = vpop.f32.mrf.mxu0
  %428 = vmatprep.mubr.bf16.mxu0 0
  %429 = vmatmul.mubr.bf16.gmra.mxu0 %v345
  %v430 = vpop.f32.mrf.mxu0
  %v431 = vadd.f32 0.0, %v430
  %v432 = vpop.f32.mrf.mxu0
  %v433 = vpop.f32.mrf.mxu0
  %v434 = vadd.f32 0.0, %v433
  %v435 = vpop.f32.mrf.mxu0
  %436 = vmatprep.mubr.bf16.mxu0 0
  %437 = vmatmul.mubr.bf16.gmra.mxu0 %v346
  %v438 = vpop.f32.mrf.mxu0
  %v439 = vadd.f32 0.0, %v438
  %v440 = vpop.f32.mrf.mxu0
  %v441 = vpop.f32.mrf.mxu0
  %v442 = vadd.f32 0.0, %v441
  %v443 = vpop.f32.mrf.mxu0
  %444 = vmatprep.mubr.bf16.mxu0 0
  %445 = vmatmul.mubr.bf16.gmra.mxu0 %v347
  %v446 = vpop.f32.mrf.mxu0
  %v447 = vadd.f32 0.0, %v446
  %v448 = vpop.f32.mrf.mxu0
  %v449 = vpop.f32.mrf.mxu0
  %v450 = vadd.f32 0.0, %v449
  %v451 = vpop.f32.mrf.mxu0
  %452 = vdwg.mxu0
  %v453 = vadd.f32 %v276, %v391
  %v454 = vadd.f32 %v277, %v394
  %v455 = vadd.f32 %v278, %v399
  %v456 = vadd.f32 %v279, %v402
  %v457 = vadd.f32 %v280, %v407
  %v458 = vadd.f32 %v281, %v410
  %v459 = vadd.f32 %v282, %v415
  %v460 = vadd.f32 %v283, %v418
  %v461 = vadd.f32 %v284, %v423
  %v462 = vadd.f32 %v285, %v426
  %v463 = vadd.f32 %v286, %v431
  %v464 = vadd.f32 %v287, %v434
  %v465 = vadd.f32 %v288, %v439
  %v466 = vadd.f32 %v289, %v442
  %v467 = vadd.f32 %v290, %v447
  %v468 = vadd.f32 %v291, %v450
  %469 = vst [vmem:[#allocation2] sm:$0xff] %v453
  %470 = vst [vmem:[#allocation2 + $0x8] sm:$0xff] %v454
  %471 = vst [vmem:[#allocation2 + $0x10] sm:$0xff] %v455
  %472 = vst [vmem:[#allocation2 + $0x18] sm:$0xff] %v456
  %473 = vst [vmem:[#allocation2 + $0x20] sm:$0xff] %v457
  %474 = vst [vmem:[#allocation2 + $0x28] sm:$0xff] %v458
  %475 = vst [vmem:[#allocation2 + $0x30] sm:$0xff] %v459
  %476 = vst [vmem:[#allocation2 + $0x38] sm:$0xff] %v460
  %477 = vst [vmem:[#allocation2 + $0x40] sm:$0xff] %v461
  %478 = vst [vmem:[#allocation2 + $0x48] sm:$0xff] %v462
  %479 = vst [vmem:[#allocation2 + $0x50] sm:$0xff] %v463
  %480 = vst [vmem:[#allocation2 + $0x58] sm:$0xff] %v464
  %481 = vst [vmem:[#allocation2 + $0x60] sm:$0xff] %v465
  %482 = vst [vmem:[#allocation2 + $0x68] sm:$0xff] %v466
  %483 = vst [vmem:[#allocation2 + $0x70] sm:$0xff] %v467
  %484 = vst [vmem:[#allocation2 + $0x78] sm:$0xff] %v468
  // Predicated region
  $region22: #{supervised_link_model.4} parent=0 // pred_check
    %p485 = pneg %p18
  $region23: #{supervised_link_model.4} parent=0 // pred_check_branch
    %487 = sbr.rel (%p485) target = $region25
  $region24: #{supervised_link_model.4} parent=0 // pred_region
    %v488 = vld [vmem:[#allocation2] sm:$0xff]
    %v489 = vld [vmem:[#allocation2 + $0x8] sm:$0xff]
    %v490 = vld [vmem:[#allocation2 + $0x10] sm:$0xff]
    %v491 = vld [vmem:[#allocation2 + $0x18] sm:$0xff]
    %v492 = vld [vmem:[#allocation2 + $0x20] sm:$0xff]
    %v493 = vld [vmem:[#allocation2 + $0x28] sm:$0xff]
    %v494 = vld [vmem:[#allocation2 + $0x30] sm:$0xff]
    %v495 = vld [vmem:[#allocation2 + $0x38] sm:$0xff]
    %v496 = vld [vmem:[#allocation2 + $0x40] sm:$0xff]
    %v497 = vld [vmem:[#allocation2 + $0x48] sm:$0xff]
    %v498 = vld [vmem:[#allocation2 + $0x50] sm:$0xff]
    %v499 = vld [vmem:[#allocation2 + $0x58] sm:$0xff]
    %v500 = vld [vmem:[#allocation2 + $0x60] sm:$0xff]
    %v501 = vld [vmem:[#allocation2 + $0x68] sm:$0xff]
    %v502 = vld [vmem:[#allocation2 + $0x70] sm:$0xff]
    %v503 = vld [vmem:[#allocation2 + $0x78] sm:$0xff]
    %v504 = vld [vmem:[%s3] sm:$0x1]
    %v506 = vlaneseq
    %v507 = vshrl.u32 %v506, 7
    %v508 = vsub.s32 0, %v507
    %v509 = vrot.slane %v504, %v508
    %v511 = vadd.f32 %v488, %v509
    %v512 = vadd.f32 %v489, %v509
    %v513 = vadd.f32 %v490, %v509
    %v514 = vadd.f32 %v491, %v509
    %v515 = vadd.f32 %v492, %v509
    %v516 = vadd.f32 %v493, %v509
    %v517 = vadd.f32 %v494, %v509
    %v518 = vadd.f32 %v495, %v509
    %v519 = vadd.f32 %v496, %v509
    %v520 = vadd.f32 %v497, %v509
    %v521 = vadd.f32 %v498, %v509
    %v522 = vadd.f32 %v499, %v509
    %v523 = vadd.f32 %v500, %v509
    %v524 = vadd.f32 %v501, %v509
    %v525 = vadd.f32 %v502, %v509
    %v526 = vadd.f32 %v503, %v509
    %v527 = vpack.c.bf16 %v512, %v511
    %v528 = vpack.c.bf16 %v514, %v513
    %v529 = vpack.c.bf16 %v516, %v515
    %v530 = vpack.c.bf16 %v518, %v517
    %v531 = vpack.c.bf16 %v520, %v519
    %v532 = vpack.c.bf16 %v522, %v521
    %v533 = vpack.c.bf16 %v524, %v523
    %v534 = vpack.c.bf16 %v526, %v525
    %v543 = vunpack.c.l.b16 %v527
    %v544 = vunpack.c.h.b16 %v527
    %v545 = vunpack.c.l.b16 %v528
    %v546 = vunpack.c.h.b16 %v528
    %v547 = vunpack.c.l.b16 %v529
    %v548 = vunpack.c.h.b16 %v529
    %v549 = vunpack.c.l.b16 %v530
    %v550 = vunpack.c.h.b16 %v530
    %v551 = vunpack.c.l.b16 %v531
    %v552 = vunpack.c.h.b16 %v531
    %v553 = vunpack.c.l.b16 %v532
    %v554 = vunpack.c.h.b16 %v532
    %v555 = vunpack.c.l.b16 %v533
    %v556 = vunpack.c.h.b16 %v533
    %v557 = vunpack.c.l.b16 %v534
    %v558 = vunpack.c.h.b16 %v534
    %v559 = vpack.c.b16 %v543, %v543
    %v560 = vpack.c.b16 %v544, %v544
    %v561 = vpack.c.b16 %v545, %v545
    %v562 = vpack.c.b16 %v546, %v546
    %v563 = vpack.c.b16 %v547, %v547
    %v564 = vpack.c.b16 %v548, %v548
    %v565 = vpack.c.b16 %v549, %v549
    %v566 = vpack.c.b16 %v550, %v550
    %v567 = vpack.c.b16 %v551, %v551
    %v568 = vpack.c.b16 %v552, %v552
    %v569 = vpack.c.b16 %v553, %v553
    %v570 = vpack.c.b16 %v554, %v554
    %v571 = vpack.c.b16 %v555, %v555
    %v572 = vpack.c.b16 %v556, %v556
    %v573 = vpack.c.b16 %v557, %v557
    %v574 = vpack.c.b16 %v558, %v558
    %591 = vst [vmem:[%s4] sm:$0xf] %v559
    %592 = vst [vmem:[%s4 + $0x4] sm:$0xf] %v560
    %593 = vst [vmem:[%s4 + $0x8] sm:$0xf] %v561
    %594 = vst [vmem:[%s4 + $0xc] sm:$0xf] %v562
    %595 = vst [vmem:[%s4 + $0x10] sm:$0xf] %v563
    %596 = vst [vmem:[%s4 + $0x14] sm:$0xf] %v564
    %597 = vst [vmem:[%s4 + $0x18] sm:$0xf] %v565
    %598 = vst [vmem:[%s4 + $0x1c] sm:$0xf] %v566
    %599 = vst [vmem:[%s4 + $0x20] sm:$0xf] %v567
    %600 = vst [vmem:[%s4 + $0x24] sm:$0xf] %v568
    %601 = vst [vmem:[%s4 + $0x28] sm:$0xf] %v569
    %602 = vst [vmem:[%s4 + $0x2c] sm:$0xf] %v570
    %603 = vst [vmem:[%s4 + $0x30] sm:$0xf] %v571
    %604 = vst [vmem:[%s4 + $0x34] sm:$0xf] %v572
    %605 = vst [vmem:[%s4 + $0x38] sm:$0xf] %v573
    %606 = vst [vmem:[%s4 + $0x3c] sm:$0xf] %v574
  $region25: #{supervised_link_model.4} parent=0 // pred_fallthru
    _
  // Predicated region
  $region26: #{supervised_link_model.4} parent=0 // pred_check
    _
  $region27: #{supervised_link_model.4} parent=0 // pred_check_branch
    %608 = sbr.rel (0) target = $region29
  $region28: #{supervised_link_model.4} parent=0 // pred_region
    _
  $region29: #{supervised_link_model.4} parent=0 // pred_fallthru
    _
  // Predicated region
  $region30: #{supervised_link_model.4} parent=0 // pred_check
    _
  $region31: #{supervised_link_model.4} parent=0 // pred_check_branch
    %610 = sbr.rel (0) target = $region33
  $region32: #{supervised_link_model.4} parent=0 // pred_region
    _
  $region33: #{supervised_link_model.4} parent=0 // pred_fallthru
    _

// kernel: supervised_link_model.3
$region0: #{supervised_link_model.3}
  #allocation0 [shape = 'u32[]', space=smem, size = 0x4, offset = 0x4, fixed_abs, tag = 'smem constant byte address 0x4 - core index']
  #allocation1 [shape = 'u32[144,128]{1,0:T(1,128)}', space=vmem, size = 0x12000, scoped, tag = 'internal scratch']
  #allocation2 [shape = 'f32[128,128]{1,0:T(8,128)}', space=vmem, size = 0x10000, scoped, tag = 'scratch operand']
  %s0 = inlined_call_operand.vmem [shape: bf16[128,128], index: 0, kind: input, shape index: {}]
  %s1 = inlined_call_operand.vmem [shape: bf16[128,128], index: 1, kind: input, shape index: {}]
  %s2 = inlined_call_operand.vmem [shape: bf16[128,128], index: 2, kind: input, shape index: {}]
  %s3 = inlined_call_operand.vmem [shape: f32[1,128], index: 3, kind: input, shape index: {}]
  %s4 = inlined_call_operand.vmem [shape: bf16[128,128], index: 4, kind: output, shape index: {}]
  %s5 = sld [smem:[#allocation0]]
  $region34: #{supervised_link_model.3} parent=0
    _
  %s7 = ssub.s32 1, %s5
  %s8 = scalar_select 0, %s7, %s5
  // Predicated region
  $region2: #{supervised_link_model.3} parent=0 // pred_check
    _
  $region3: #{supervised_link_model.3} parent=0 // pred_check_branch
    %10 = sbr.rel (0) target = $region5
  $region4: #{supervised_link_model.3} parent=0 // pred_region
    _
  $region5: #{supervised_link_model.3} parent=0 // pred_fallthru
    _
  // Predicated region
  $region6: #{supervised_link_model.3} parent=0 // pred_check
    _
  $region7: #{supervised_link_model.3} parent=0 // pred_check_branch
    %12 = sbr.rel (0) target = $region9
  $region8: #{supervised_link_model.3} parent=0 // pred_region
    _
  $region9: #{supervised_link_model.3} parent=0 // pred_fallthru
    _
  // Predicated region
  $region10: #{supervised_link_model.3} parent=0 // pred_check
    _
  $region11: #{supervised_link_model.3} parent=0 // pred_check_branch
    %14 = sbr.rel (0) target = $region13
  $region12: #{supervised_link_model.3} parent=0 // pred_region
    _
  $region13: #{supervised_link_model.3} parent=0 // pred_fallthru
    _
  // Predicated region
  $region14: #{supervised_link_model.3} parent=0 // pred_check
    _
  $region15: #{supervised_link_model.3} parent=0 // pred_check_branch
    %16 = sbr.rel (0) target = $region17
  $region16: #{supervised_link_model.3} parent=0 // pred_region
    _
  $region17: #{supervised_link_model.3} parent=0 // pred_fallthru
    _
  %p18 = scmp.eq.s32.totalorder 0, 0
  // Predicated region
  $region18: #{supervised_link_model.3} parent=0 // pred_check
    %p19 = pneg %p18
  $region19: #{supervised_link_model.3} parent=0 // pred_check_branch
    %21 = sbr.rel (%p19) target = $region21
  $region20: #{supervised_link_model.3} parent=0 // pred_region
    %22 = vst [vmem:[#allocation2] sm:$0xff] 0.0
    %23 = vst [vmem:[#allocation2 + $0x8] sm:$0xff] 0.0
    %24 = vst [vmem:[#allocation2 + $0x10] sm:$0xff] 0.0
    %25 = vst [vmem:[#allocation2 + $0x18] sm:$0xff] 0.0
    %26 = vst [vmem:[#allocation2 + $0x20] sm:$0xff] 0.0
    %27 = vst [vmem:[#allocation2 + $0x28] sm:$0xff] 0.0
    %28 = vst [vmem:[#allocation2 + $0x30] sm:$0xff] 0.0
    %29 = vst [vmem:[#allocation2 + $0x38] sm:$0xff] 0.0
    %30 = vst [vmem:[#allocation2 + $0x40] sm:$0xff] 0.0
    %31 = vst [vmem:[#allocation2 + $0x48] sm:$0xff] 0.0
    %32 = vst [vmem:[#allocation2 + $0x50] sm:$0xff] 0.0
    %33 = vst [vmem:[#allocation2 + $0x58] sm:$0xff] 0.0
    %34 = vst [vmem:[#allocation2 + $0x60] sm:$0xff] 0.0
    %35 = vst [vmem:[#allocation2 + $0x68] sm:$0xff] 0.0
    %36 = vst [vmem:[#allocation2 + $0x70] sm:$0xff] 0.0
    %37 = vst [vmem:[#allocation2 + $0x78] sm:$0xff] 0.0
  $region21: #{supervised_link_model.3} parent=0 // pred_fallthru
    _
  %s38 = smul.u32 0, 128
  %s39 = sshra.s32 %s38, 3
  %s40 = sand.u32 %s38, 7
  %s41 = smul.addr %s39, 4
  %s42 = scalar_lea.vmem %s1, %s41
  %v43 = vld [vmem:[%s42] sm:$0xf]
  %v44 = vld [vmem:[%s42 + $0x4] sm:$0xf]
  %v45 = vld [vmem:[%s42 + $0x8] sm:$0xf]
  %v46 = vld [vmem:[%s42 + $0xc] sm:$0xf]
  %v47 = vld [vmem:[%s42 + $0x10] sm:$0xf]
  %v48 = vld [vmem:[%s42 + $0x14] sm:$0xf]
  %v49 = vld [vmem:[%s42 + $0x18] sm:$0xf]
  %v50 = vld [vmem:[%s42 + $0x1c] sm:$0xf]
  %v51 = vld [vmem:[%s42 + $0x20] sm:$0xf]
  %v52 = vld [vmem:[%s42 + $0x24] sm:$0xf]
  %v53 = vld [vmem:[%s42 + $0x28] sm:$0xf]
  %v54 = vld [vmem:[%s42 + $0x2c] sm:$0xf]
  %v55 = vld [vmem:[%s42 + $0x30] sm:$0xf]
  %v56 = vld [vmem:[%s42 + $0x34] sm:$0xf]
  %v57 = vld [vmem:[%s42 + $0x38] sm:$0xf]
  %v58 = vld [vmem:[%s42 + $0x3c] sm:$0xf]
  %v59 = vld [vmem:[%s2] sm:$0xf]
  %v60 = vld [vmem:[%s2 + $0x4] sm:$0xf]
  %v61 = vld [vmem:[%s2 + $0x8] sm:$0xf]
  %v62 = vld [vmem:[%s2 + $0xc] sm:$0xf]
  %v63 = vld [vmem:[%s2 + $0x10] sm:$0xf]
  %v64 = vld [vmem:[%s2 + $0x14] sm:$0xf]
  %v65 = vld [vmem:[%s2 + $0x18] sm:$0xf]
  %v66 = vld [vmem:[%s2 + $0x1c] sm:$0xf]
  %v67 = vld [vmem:[%s2 + $0x20] sm:$0xf]
  %v68 = vld [vmem:[%s2 + $0x24] sm:$0xf]
  %v69 = vld [vmem:[%s2 + $0x28] sm:$0xf]
  %v70 = vld [vmem:[%s2 + $0x2c] sm:$0xf]
  %v71 = vld [vmem:[%s2 + $0x30] sm:$0xf]
  %v72 = vld [vmem:[%s2 + $0x34] sm:$0xf]
  %v73 = vld [vmem:[%s2 + $0x38] sm:$0xf]
  %v74 = vld [vmem:[%s2 + $0x3c] sm:$0xf]
  %v91 = vunpack.c.l.b16 %v43
  %v92 = vunpack.c.l.b16 %v44
  %v93 = vunpack.c.l.b16 %v45
  %v94 = vunpack.c.l.b16 %v46
  %v95 = vunpack.c.l.b16 %v47
  %v96 = vunpack.c.l.b16 %v48
  %v97 = vunpack.c.l.b16 %v49
  %v98 = vunpack.c.l.b16 %v50
  %v99 = vunpack.c.l.b16 %v51
  %v100 = vunpack.c.l.b16 %v52
  %v101 = vunpack.c.l.b16 %v53
  %v102 = vunpack.c.l.b16 %v54
  %v103 = vunpack.c.l.b16 %v55
  %v104 = vunpack.c.l.b16 %v56
  %v105 = vunpack.c.l.b16 %v57
  %v106 = vunpack.c.l.b16 %v58
  %v107 = vpack.c.b16 %v92, %v91
  %v108 = vpack.c.b16 %v94, %v93
  %v109 = vpack.c.b16 %v96, %v95
  %v110 = vpack.c.b16 %v98, %v97
  %v111 = vpack.c.b16 %v100, %v99
  %v112 = vpack.c.b16 %v102, %v101
  %v113 = vpack.c.b16 %v104, %v103
  %v114 = vpack.c.b16 %v106, %v105
  %v139 = vunpack.c.l.b16 %v59
  %v140 = vunpack.c.l.b16 %v60
  %v141 = vunpack.c.l.b16 %v61
  %v142 = vunpack.c.l.b16 %v62
  %v143 = vunpack.c.l.b16 %v63
  %v144 = vunpack.c.l.b16 %v64
  %v145 = vunpack.c.l.b16 %v65
  %v146 = vunpack.c.l.b16 %v66
  %v147 = vunpack.c.l.b16 %v67
  %v148 = vunpack.c.l.b16 %v68
  %v149 = vunpack.c.l.b16 %v69
  %v150 = vunpack.c.l.b16 %v70
  %v151 = vunpack.c.l.b16 %v71
  %v152 = vunpack.c.l.b16 %v72
  %v153 = vunpack.c.l.b16 %v73
  %v154 = vunpack.c.l.b16 %v74
  %v155 = vpack.c.b16 %v140, %v139
  %v156 = vpack.c.b16 %v142, %v141
  %v157 = vpack.c.b16 %v144, %v143
  %v158 = vpack.c.b16 %v146, %v145
  %v159 = vpack.c.b16 %v148, %v147
  %v160 = vpack.c.b16 %v150, %v149
  %v161 = vpack.c.b16 %v152, %v151
  %v162 = vpack.c.b16 %v154, %v153
  %171 = vmatprep.subr.bf16.mxu0 0
  %172 = vmatpush1.bf16.msra.mxu0 %v162
  %173 = vmatprep.subr.bf16.mxu0 0
  %174 = vmatpush1.bf16.msra.mxu0 %v161
  %175 = vmatprep.subr.bf16.mxu0 0
  %176 = vmatpush1.bf16.msra.mxu0 %v160
  %177 = vmatprep.subr.bf16.mxu0 0
  %178 = vmatpush1.bf16.msra.mxu0 %v159
  %179 = vmatprep.subr.bf16.mxu0 0
  %180 = vmatpush1.bf16.msra.mxu0 %v158
  %181 = vmatprep.subr.bf16.mxu0 0
  %182 = vmatpush1.bf16.msra.mxu0 %v157
  %183 = vmatprep.subr.bf16.mxu0 0
  %184 = vmatpush1.bf16.msra.mxu0 %v156
  %185 = vmatprep.subr.bf16.mxu0 0
  %186 = vmatpush1.bf16.msra.mxu0 %v155
  %187 = vmatprep.subr.bf16.mxu0 0
  %188 = vmatpush2.bf16.msra.mxu0 0
  %189 = vmatprep.subr.bf16.mxu0 0
  %190 = vmatpush2.bf16.msra.mxu0 0
  %191 = vmatprep.subr.bf16.mxu0 0
  %192 = vmatpush2.bf16.msra.mxu0 0
  %193 = vmatprep.subr.bf16.mxu0 0
  %194 = vmatpush2.bf16.msra.mxu0 0
  %195 = vmatprep.subr.bf16.mxu0 0
  %196 = vmatpush2.bf16.msra.mxu0 0
  %197 = vmatprep.subr.bf16.mxu0 0
  %198 = vmatpush2.bf16.msra.mxu0 0
  %199 = vmatprep.subr.bf16.mxu0 0
  %200 = vmatpush2.bf16.msra.mxu0 0
  %201 = vmatprep.subr.bf16.mxu0 0
  %202 = vmatpush2.bf16.msra.mxu0 0
  %203 = vmatprep.mubr.bf16.mxu0 0
  %204 = vmatmul.mubr.bf16.gmra.mxu0 %v107
  %v205 = vpop.f32.mrf.mxu0
  %v206 = vadd.f32 0.0, %v205
  %v207 = vpop.f32.mrf.mxu0
  %v208 = vpop.f32.mrf.mxu0
  %v209 = vadd.f32 0.0, %v208
  %v210 = vpop.f32.mrf.mxu0
  %211 = vmatprep.mubr.bf16.mxu0 0
  %212 = vmatmul.mubr.bf16.gmra.mxu0 %v108
  %v213 = vpop.f32.mrf.mxu0
  %v214 = vadd.f32 0.0, %v213
  %v215 = vpop.f32.mrf.mxu0
  %v216 = vpop.f32.mrf.mxu0
  %v217 = vadd.f32 0.0, %v216
  %v218 = vpop.f32.mrf.mxu0
  %219 = vmatprep.mubr.bf16.mxu0 0
  %220 = vmatmul.mubr.bf16.gmra.mxu0 %v109
  %v221 = vpop.f32.mrf.mxu0
  %v222 = vadd.f32 0.0, %v221
  %v223 = vpop.f32.mrf.mxu0
  %v224 = vpop.f32.mrf.mxu0
  %v225 = vadd.f32 0.0, %v224
  %v226 = vpop.f32.mrf.mxu0
  %227 = vmatprep.mubr.bf16.mxu0 0
  %228 = vmatmul.mubr.bf16.gmra.mxu0 %v110
  %v229 = vpop.f32.mrf.mxu0
  %v230 = vadd.f32 0.0, %v229
  %v231 = vpop.f32.mrf.mxu0
  %v232 = vpop.f32.mrf.mxu0
  %v233 = vadd.f32 0.0, %v232
  %v234 = vpop.f32.mrf.mxu0
  %235 = vmatprep.mubr.bf16.mxu0 0
  %236 = vmatmul.mubr.bf16.gmra.mxu0 %v111
  %v237 = vpop.f32.mrf.mxu0
  %v238 = vadd.f32 0.0, %v237
  %v239 = vpop.f32.mrf.mxu0
  %v240 = vpop.f32.mrf.mxu0
  %v241 = vadd.f32 0.0, %v240
  %v242 = vpop.f32.mrf.mxu0
  %243 = vmatprep.mubr.bf16.mxu0 0
  %244 = vmatmul.mubr.bf16.gmra.mxu0 %v112
  %v245 = vpop.f32.mrf.mxu0
  %v246 = vadd.f32 0.0, %v245
  %v247 = vpop.f32.mrf.mxu0
  %v248 = vpop.f32.mrf.mxu0
  %v249 = vadd.f32 0.0, %v248
  %v250 = vpop.f32.mrf.mxu0
  %251 = vmatprep.mubr.bf16.mxu0 0
  %252 = vmatmul.mubr.bf16.gmra.mxu0 %v113
  %v253 = vpop.f32.mrf.mxu0
  %v254 = vadd.f32 0.0, %v253
  %v255 = vpop.f32.mrf.mxu0
  %v256 = vpop.f32.mrf.mxu0
  %v257 = vadd.f32 0.0, %v256
  %v258 = vpop.f32.mrf.mxu0
  %259 = vmatprep.mubr.bf16.mxu0 0
  %260 = vmatmul.mubr.bf16.gmra.mxu0 %v114
  %v261 = vpop.f32.mrf.mxu0
  %v262 = vadd.f32 0.0, %v261
  %v263 = vpop.f32.mrf.mxu0
  %v264 = vpop.f32.mrf.mxu0
  %v265 = vadd.f32 0.0, %v264
  %v266 = vpop.f32.mrf.mxu0
  %267 = vdwg.mxu0
  %v268 = vpack.c.bf16 %v209, %v206
  %v269 = vpack.c.bf16 %v217, %v214
  %v270 = vpack.c.bf16 %v225, %v222
  %v271 = vpack.c.bf16 %v233, %v230
  %v272 = vpack.c.bf16 %v241, %v238
  %v273 = vpack.c.bf16 %v249, %v246
  %v274 = vpack.c.bf16 %v257, %v254
  %v275 = vpack.c.bf16 %v265, %v262
  %v276 = vld [vmem:[#allocation2] sm:$0xff]
  %v277 = vld [vmem:[#allocation2 + $0x8] sm:$0xff]
  %v278 = vld [vmem:[#allocation2 + $0x10] sm:$0xff]
  %v279 = vld [vmem:[#allocation2 + $0x18] sm:$0xff]
  %v280 = vld [vmem:[#allocation2 + $0x20] sm:$0xff]
  %v281 = vld [vmem:[#allocation2 + $0x28] sm:$0xff]
  %v282 = vld [vmem:[#allocation2 + $0x30] sm:$0xff]
  %v283 = vld [vmem:[#allocation2 + $0x38] sm:$0xff]
  %v284 = vld [vmem:[#allocation2 + $0x40] sm:$0xff]
  %v285 = vld [vmem:[#allocation2 + $0x48] sm:$0xff]
  %v286 = vld [vmem:[#allocation2 + $0x50] sm:$0xff]
  %v287 = vld [vmem:[#allocation2 + $0x58] sm:$0xff]
  %v288 = vld [vmem:[#allocation2 + $0x60] sm:$0xff]
  %v289 = vld [vmem:[#allocation2 + $0x68] sm:$0xff]
  %v290 = vld [vmem:[#allocation2 + $0x70] sm:$0xff]
  %v291 = vld [vmem:[#allocation2 + $0x78] sm:$0xff]
  %v292 = vld [vmem:[%s0] sm:$0xf]
  %v293 = vld [vmem:[%s0 + $0x4] sm:$0xf]
  %v294 = vld [vmem:[%s0 + $0x8] sm:$0xf]
  %v295 = vld [vmem:[%s0 + $0xc] sm:$0xf]
  %v296 = vld [vmem:[%s0 + $0x10] sm:$0xf]
  %v297 = vld [vmem:[%s0 + $0x14] sm:$0xf]
  %v298 = vld [vmem:[%s0 + $0x18] sm:$0xf]
  %v299 = vld [vmem:[%s0 + $0x1c] sm:$0xf]
  %v300 = vld [vmem:[%s0 + $0x20] sm:$0xf]
  %v301 = vld [vmem:[%s0 + $0x24] sm:$0xf]
  %v302 = vld [vmem:[%s0 + $0x28] sm:$0xf]
  %v303 = vld [vmem:[%s0 + $0x2c] sm:$0xf]
  %v304 = vld [vmem:[%s0 + $0x30] sm:$0xf]
  %v305 = vld [vmem:[%s0 + $0x34] sm:$0xf]
  %v306 = vld [vmem:[%s0 + $0x38] sm:$0xf]
  %v307 = vld [vmem:[%s0 + $0x3c] sm:$0xf]
  %v324 = vunpack.c.l.b16 %v292
  %v325 = vunpack.c.l.b16 %v293
  %v326 = vunpack.c.l.b16 %v294
  %v327 = vunpack.c.l.b16 %v295
  %v328 = vunpack.c.l.b16 %v296
  %v329 = vunpack.c.l.b16 %v297
  %v330 = vunpack.c.l.b16 %v298
  %v331 = vunpack.c.l.b16 %v299
  %v332 = vunpack.c.l.b16 %v300
  %v333 = vunpack.c.l.b16 %v301
  %v334 = vunpack.c.l.b16 %v302
  %v335 = vunpack.c.l.b16 %v303
  %v336 = vunpack.c.l.b16 %v304
  %v337 = vunpack.c.l.b16 %v305
  %v338 = vunpack.c.l.b16 %v306
  %v339 = vunpack.c.l.b16 %v307
  %v340 = vpack.c.b16 %v325, %v324
  %v341 = vpack.c.b16 %v327, %v326
  %v342 = vpack.c.b16 %v329, %v328
  %v343 = vpack.c.b16 %v331, %v330
  %v344 = vpack.c.b16 %v333, %v332
  %v345 = vpack.c.b16 %v335, %v334
  %v346 = vpack.c.b16 %v337, %v336
  %v347 = vpack.c.b16 %v339, %v338
  %356 = vmatprep.subr.bf16.mxu0 0
  %357 = vmatpush1.bf16.msra.mxu0 %v275
  %358 = vmatprep.subr.bf16.mxu0 0
  %359 = vmatpush1.bf16.msra.mxu0 %v274
  %360 = vmatprep.subr.bf16.mxu0 0
  %361 = vmatpush1.bf16.msra.mxu0 %v273
  %362 = vmatprep.subr.bf16.mxu0 0
  %363 = vmatpush1.bf16.msra.mxu0 %v272
  %364 = vmatprep.subr.bf16.mxu0 0
  %365 = vmatpush1.bf16.msra.mxu0 %v271
  %366 = vmatprep.subr.bf16.mxu0 0
  %367 = vmatpush1.bf16.msra.mxu0 %v270
  %368 = vmatprep.subr.bf16.mxu0 0
  %369 = vmatpush1.bf16.msra.mxu0 %v269
  %370 = vmatprep.subr.bf16.mxu0 0
  %371 = vmatpush1.bf16.msra.mxu0 %v268
  %372 = vmatprep.subr.bf16.mxu0 0
  %373 = vmatpush2.bf16.msra.mxu0 0
  %374 = vmatprep.subr.bf16.mxu0 0
  %375 = vmatpush2.bf16.msra.mxu0 0
  %376 = vmatprep.subr.bf16.mxu0 0
  %377 = vmatpush2.bf16.msra.mxu0 0
  %378 = vmatprep.subr.bf16.mxu0 0
  %379 = vmatpush2.bf16.msra.mxu0 0
  %380 = vmatprep.subr.bf16.mxu0 0
  %381 = vmatpush2.bf16.msra.mxu0 0
  %382 = vmatprep.subr.bf16.mxu0 0
  %383 = vmatpush2.bf16.msra.mxu0 0
  %384 = vmatprep.subr.bf16.mxu0 0
  %385 = vmatpush2.bf16.msra.mxu0 0
  %386 = vmatprep.subr.bf16.mxu0 0
  %387 = vmatpush2.bf16.msra.mxu0 0
  %388 = vmatprep.mubr.bf16.mxu0 0
  %389 = vmatmul.mubr.bf16.gmra.mxu0 %v340
  %v390 = vpop.f32.mrf.mxu0
  %v391 = vadd.f32 0.0, %v390
  %v392 = vpop.f32.mrf.mxu0
  %v393 = vpop.f32.mrf.mxu0
  %v394 = vadd.f32 0.0, %v393
  %v395 = vpop.f32.mrf.mxu0
  %396 = vmatprep.mubr.bf16.mxu0 0
  %397 = vmatmul.mubr.bf16.gmra.mxu0 %v341
  %v398 = vpop.f32.mrf.mxu0
  %v399 = vadd.f32 0.0, %v398
  %v400 = vpop.f32.mrf.mxu0
  %v401 = vpop.f32.mrf.mxu0
  %v402 = vadd.f32 0.0, %v401
  %v403 = vpop.f32.mrf.mxu0
  %404 = vmatprep.mubr.bf16.mxu0 0
  %405 = vmatmul.mubr.bf16.gmra.mxu0 %v342
  %v406 = vpop.f32.mrf.mxu0
  %v407 = vadd.f32 0.0, %v406
  %v408 = vpop.f32.mrf.mxu0
  %v409 = vpop.f32.mrf.mxu0
  %v410 = vadd.f32 0.0, %v409
  %v411 = vpop.f32.mrf.mxu0
  %412 = vmatprep.mubr.bf16.mxu0 0
  %413 = vmatmul.mubr.bf16.gmra.mxu0 %v343
  %v414 = vpop.f32.mrf.mxu0
  %v415 = vadd.f32 0.0, %v414
  %v416 = vpop.f32.mrf.mxu0
  %v417 = vpop.f32.mrf.mxu0
  %v418 = vadd.f32 0.0, %v417
  %v419 = vpop.f32.mrf.mxu0
  %420 = vmatprep.mubr.bf16.mxu0 0
  %421 = vmatmul.mubr.bf16.gmra.mxu0 %v344
  %v422 = vpop.f32.mrf.mxu0
  %v423 = vadd.f32 0.0, %v422
  %v424 = vpop.f32.mrf.mxu0
  %v425 = vpop.f32.mrf.mxu0
  %v426 = vadd.f32 0.0, %v425
  %v427 = vpop.f32.mrf.mxu0
  %428 = vmatprep.mubr.bf16.mxu0 0
  %429 = vmatmul.mubr.bf16.gmra.mxu0 %v345
  %v430 = vpop.f32.mrf.mxu0
  %v431 = vadd.f32 0.0, %v430
  %v432 = vpop.f32.mrf.mxu0
  %v433 = vpop.f32.mrf.mxu0
  %v434 = vadd.f32 0.0, %v433
  %v435 = vpop.f32.mrf.mxu0
  %436 = vmatprep.mubr.bf16.mxu0 0
  %437 = vmatmul.mubr.bf16.gmra.mxu0 %v346
  %v438 = vpop.f32.mrf.mxu0
  %v439 = vadd.f32 0.0, %v438
  %v440 = vpop.f32.mrf.mxu0
  %v441 = vpop.f32.mrf.mxu0
  %v442 = vadd.f32 0.0, %v441
  %v443 = vpop.f32.mrf.mxu0
  %444 = vmatprep.mubr.bf16.mxu0 0
  %445 = vmatmul.mubr.bf16.gmra.mxu0 %v347
  %v446 = vpop.f32.mrf.mxu0
  %v447 = vadd.f32 0.0, %v446
  %v448 = vpop.f32.mrf.mxu0
  %v449 = vpop.f32.mrf.mxu0
  %v450 = vadd.f32 0.0, %v449
  %v451 = vpop.f32.mrf.mxu0
  %452 = vdwg.mxu0
  %v453 = vadd.f32 %v276, %v391
  %v454 = vadd.f32 %v277, %v394
  %v455 = vadd.f32 %v278, %v399
  %v456 = vadd.f32 %v279, %v402
  %v457 = vadd.f32 %v280, %v407
  %v458 = vadd.f32 %v281, %v410
  %v459 = vadd.f32 %v282, %v415
  %v460 = vadd.f32 %v283, %v418
  %v461 = vadd.f32 %v284, %v423
  %v462 = vadd.f32 %v285, %v426
  %v463 = vadd.f32 %v286, %v431
  %v464 = vadd.f32 %v287, %v434
  %v465 = vadd.f32 %v288, %v439
  %v466 = vadd.f32 %v289, %v442
  %v467 = vadd.f32 %v290, %v447
  %v468 = vadd.f32 %v291, %v450
  %469 = vst [vmem:[#allocation2] sm:$0xff] %v453
  %470 = vst [vmem:[#allocation2 + $0x8] sm:$0xff] %v454
  %471 = vst [vmem:[#allocation2 + $0x10] sm:$0xff] %v455
  %472 = vst [vmem:[#allocation2 + $0x18] sm:$0xff] %v456
  %473 = vst [vmem:[#allocation2 + $0x20] sm:$0xff] %v457
  %474 = vst [vmem:[#allocation2 + $0x28] sm:$0xff] %v458
  %475 = vst [vmem:[#allocation2 + $0x30] sm:$0xff] %v459
  %476 = vst [vmem:[#allocation2 + $0x38] sm:$0xff] %v460
  %477 = vst [vmem:[#allocation2 + $0x40] sm:$0xff] %v461
  %478 = vst [vmem:[#allocation2 + $0x48] sm:$0xff] %v462
  %479 = vst [vmem:[#allocation2 + $0x50] sm:$0xff] %v463
  %480 = vst [vmem:[#allocation2 + $0x58] sm:$0xff] %v464
  %481 = vst [vmem:[#allocation2 + $0x60] sm:$0xff] %v465
  %482 = vst [vmem:[#allocation2 + $0x68] sm:$0xff] %v466
  %483 = vst [vmem:[#allocation2 + $0x70] sm:$0xff] %v467
  %484 = vst [vmem:[#allocation2 + $0x78] sm:$0xff] %v468
  // Predicated region
  $region22: #{supervised_link_model.3} parent=0 // pred_check
    %p485 = pneg %p18
  $region23: #{supervised_link_model.3} parent=0 // pred_check_branch
    %487 = sbr.rel (%p485) target = $region25
  $region24: #{supervised_link_model.3} parent=0 // pred_region
    %v488 = vld [vmem:[#allocation2] sm:$0xff]
    %v489 = vld [vmem:[#allocation2 + $0x8] sm:$0xff]
    %v490 = vld [vmem:[#allocation2 + $0x10] sm:$0xff]
    %v491 = vld [vmem:[#allocation2 + $0x18] sm:$0xff]
    %v492 = vld [vmem:[#allocation2 + $0x20] sm:$0xff]
    %v493 = vld [vmem:[#allocation2 + $0x28] sm:$0xff]
    %v494 = vld [vmem:[#allocation2 + $0x30] sm:$0xff]
    %v495 = vld [vmem:[#allocation2 + $0x38] sm:$0xff]
    %v496 = vld [vmem:[#allocation2 + $0x40] sm:$0xff]
    %v497 = vld [vmem:[#allocation2 + $0x48] sm:$0xff]
    %v498 = vld [vmem:[#allocation2 + $0x50] sm:$0xff]
    %v499 = vld [vmem:[#allocation2 + $0x58] sm:$0xff]
    %v500 = vld [vmem:[#allocation2 + $0x60] sm:$0xff]
    %v501 = vld [vmem:[#allocation2 + $0x68] sm:$0xff]
    %v502 = vld [vmem:[#allocation2 + $0x70] sm:$0xff]
    %v503 = vld [vmem:[#allocation2 + $0x78] sm:$0xff]
    %v504 = vld [vmem:[%s3] sm:$0x1]
    %v506 = vlaneseq
    %v507 = vshrl.u32 %v506, 7
    %v508 = vsub.s32 0, %v507
    %v509 = vrot.slane %v504, %v508
    %v511 = vadd.f32 %v488, %v509
    %v512 = vadd.f32 %v489, %v509
    %v513 = vadd.f32 %v490, %v509
    %v514 = vadd.f32 %v491, %v509
    %v515 = vadd.f32 %v492, %v509
    %v516 = vadd.f32 %v493, %v509
    %v517 = vadd.f32 %v494, %v509
    %v518 = vadd.f32 %v495, %v509
    %v519 = vadd.f32 %v496, %v509
    %v520 = vadd.f32 %v497, %v509
    %v521 = vadd.f32 %v498, %v509
    %v522 = vadd.f32 %v499, %v509
    %v523 = vadd.f32 %v500, %v509
    %v524 = vadd.f32 %v501, %v509
    %v525 = vadd.f32 %v502, %v509
    %v526 = vadd.f32 %v503, %v509
    %v527 = vmax.f32 %v511, 0.0
    %v528 = vmax.f32 %v512, 0.0
    %v529 = vmax.f32 %v513, 0.0
    %v530 = vmax.f32 %v514, 0.0
    %v531 = vmax.f32 %v515, 0.0
    %v532 = vmax.f32 %v516, 0.0
    %v533 = vmax.f32 %v517, 0.0
    %v534 = vmax.f32 %v518, 0.0
    %v535 = vmax.f32 %v519, 0.0
    %v536 = vmax.f32 %v520, 0.0
    %v537 = vmax.f32 %v521, 0.0
    %v538 = vmax.f32 %v522, 0.0
    %v539 = vmax.f32 %v523, 0.0
    %v540 = vmax.f32 %v524, 0.0
    %v541 = vmax.f32 %v525, 0.0
    %v542 = vmax.f32 %v526, 0.0
    %v543 = vpack.c.bf16 %v528, %v527
    %v544 = vpack.c.bf16 %v530, %v529
    %v545 = vpack.c.bf16 %v532, %v531
    %v546 = vpack.c.bf16 %v534, %v533
    %v547 = vpack.c.bf16 %v536, %v535
    %v548 = vpack.c.bf16 %v538, %v537
    %v549 = vpack.c.bf16 %v540, %v539
    %v550 = vpack.c.bf16 %v542, %v541
    %v559 = vunpack.c.l.b16 %v543
    %v560 = vunpack.c.h.b16 %v543
    %v561 = vunpack.c.l.b16 %v544
    %v562 = vunpack.c.h.b16 %v544
    %v563 = vunpack.c.l.b16 %v545
    %v564 = vunpack.c.h.b16 %v545
    %v565 = vunpack.c.l.b16 %v546
    %v566 = vunpack.c.h.b16 %v546
    %v567 = vunpack.c.l.b16 %v547
    %v568 = vunpack.c.h.b16 %v547
    %v569 = vunpack.c.l.b16 %v548
    %v570 = vunpack.c.h.b16 %v548
    %v571 = vunpack.c.l.b16 %v549
    %v572 = vunpack.c.h.b16 %v549
    %v573 = vunpack.c.l.b16 %v550
    %v574 = vunpack.c.h.b16 %v550
    %v575 = vpack.c.b16 %v559, %v559
    %v576 = vpack.c.b16 %v560, %v560
    %v577 = vpack.c.b16 %v561, %v561
    %v578 = vpack.c.b16 %v562, %v562
    %v579 = vpack.c.b16 %v563, %v563
    %v580 = vpack.c.b16 %v564, %v564
    %v581 = vpack.c.b16 %v565, %v565
    %v582 = vpack.c.b16 %v566, %v566
    %v583 = vpack.c.b16 %v567, %v567
    %v584 = vpack.c.b16 %v568, %v568
    %v585 = vpack.c.b16 %v569, %v569
    %v586 = vpack.c.b16 %v570, %v570
    %v587 = vpack.c.b16 %v571, %v571
    %v588 = vpack.c.b16 %v572, %v572
    %v589 = vpack.c.b16 %v573, %v573
    %v590 = vpack.c.b16 %v574, %v574
    %607 = vst [vmem:[%s4] sm:$0xf] %v575
    %608 = vst [vmem:[%s4 + $0x4] sm:$0xf] %v576
    %609 = vst [vmem:[%s4 + $0x8] sm:$0xf] %v577
    %610 = vst [vmem:[%s4 + $0xc] sm:$0xf] %v578
    %611 = vst [vmem:[%s4 + $0x10] sm:$0xf] %v579
    %612 = vst [vmem:[%s4 + $0x14] sm:$0xf] %v580
    %613 = vst [vmem:[%s4 + $0x18] sm:$0xf] %v581
    %614 = vst [vmem:[%s4 + $0x1c] sm:$0xf] %v582
    %615 = vst [vmem:[%s4 + $0x20] sm:$0xf] %v583
    %616 = vst [vmem:[%s4 + $0x24] sm:$0xf] %v584
    %617 = vst [vmem:[%s4 + $0x28] sm:$0xf] %v585
    %618 = vst [vmem:[%s4 + $0x2c] sm:$0xf] %v586
    %619 = vst [vmem:[%s4 + $0x30] sm:$0xf] %v587
    %620 = vst [vmem:[%s4 + $0x34] sm:$0xf] %v588
    %621 = vst [vmem:[%s4 + $0x38] sm:$0xf] %v589
    %622 = vst [vmem:[%s4 + $0x3c] sm:$0xf] %v590
  $region25: #{supervised_link_model.3} parent=0 // pred_fallthru
    _
  // Predicated region
  $region26: #{supervised_link_model.3} parent=0 // pred_check
    _
  $region27: #{supervised_link_model.3} parent=0 // pred_check_branch
    %624 = sbr.rel (0) target = $region29
  $region28: #{supervised_link_model.3} parent=0 // pred_region
    _
  $region29: #{supervised_link_model.3} parent=0 // pred_fallthru
    _
  // Predicated region
  $region30: #{supervised_link_model.3} parent=0 // pred_check
    _
  $region31: #{supervised_link_model.3} parent=0 // pred_check_branch
    %626 = sbr.rel (0) target = $region33
  $region32: #{supervised_link_model.3} parent=0 // pred_region
    _
  $region33: #{supervised_link_model.3} parent=0 // pred_fallthru
    _

// kernel: supervised_link_model.5
$region0: #{supervised_link_model.5}
  #allocation0 [shape = 'u32[]', space=smem, size = 0x4, offset = 0x4, fixed_abs, tag = 'smem constant byte address 0x4 - core index']
  #allocation1 [shape = 'u32[144,128]{1,0:T(1,128)}', space=vmem, size = 0x12000, scoped, tag = 'internal scratch']
  #allocation2 [shape = 'f32[1,1]{1,0:T(1,128)S(6)}', space=smem, size = 0x200, scoped, tag = 'scoped memory for supervised_link_model.5']
  %s0 = inlined_call_operand.vmem [shape: bf16[128,128], index: 0, kind: input, shape index: {}]
  %s1 = inlined_call_operand.vmem [shape: bf16[128,128], index: 1, kind: input, shape index: {}]
  %s2 = inlined_call_operand.vmem [shape: bf16[128,128], index: 2, kind: input, shape index: {}]
  %s3 = inlined_call_operand.vmem [shape: bf16[128,128], index: 3, kind: input, shape index: {}]
  %s4 = inlined_call_operand.vmem [shape: f32[1,128], index: 4, kind: input, shape index: {}]
  %s5 = inlined_call_operand.vmem [shape: f32[1,128], index: 5, kind: input, shape index: {}]
  %s6 = inlined_call_operand.<no memory space> [shape: f32[1,1], index: 6, kind: input, shape index: {}]
  %s7 = inlined_call_operand.vmem [shape: f32[1,128], index: 7, kind: output, shape index: {}]
  %s8 = sld [smem:[#allocation0]]
  $region38: #{supervised_link_model.5} parent=0
    _
  %s10 = ssub.s32 1, %s8
  %s11 = scalar_select 0, %s10, %s8
  %12 = sst [smem:[#allocation2]] %s6
  // Predicated region
  $region2: #{supervised_link_model.5} parent=0 // pred_check
    _
  $region3: #{supervised_link_model.5} parent=0 // pred_check_branch
    %14 = sbr.rel (0) target = $region5
  $region4: #{supervised_link_model.5} parent=0 // pred_region
    _
  $region5: #{supervised_link_model.5} parent=0 // pred_fallthru
    _
  // Predicated region
  $region6: #{supervised_link_model.5} parent=0 // pred_check
    _
  $region7: #{supervised_link_model.5} parent=0 // pred_check_branch
    %16 = sbr.rel (0) target = $region9
  $region8: #{supervised_link_model.5} parent=0 // pred_region
    _
  $region9: #{supervised_link_model.5} parent=0 // pred_fallthru
    _
  // Predicated region
  $region10: #{supervised_link_model.5} parent=0 // pred_check
    _
  $region11: #{supervised_link_model.5} parent=0 // pred_check_branch
    %18 = sbr.rel (0) target = $region13
  $region12: #{supervised_link_model.5} parent=0 // pred_region
    _
  $region13: #{supervised_link_model.5} parent=0 // pred_fallthru
    _
  // Predicated region
  $region14: #{supervised_link_model.5} parent=0 // pred_check
    _
  $region15: #{supervised_link_model.5} parent=0 // pred_check_branch
    %20 = sbr.rel (0) target = $region17
  $region16: #{supervised_link_model.5} parent=0 // pred_region
    _
  $region17: #{supervised_link_model.5} parent=0 // pred_fallthru
    _
  // Predicated region
  $region18: #{supervised_link_model.5} parent=0 // pred_check
    _
  $region19: #{supervised_link_model.5} parent=0 // pred_check_branch
    %22 = sbr.rel (0) target = $region21
  $region20: #{supervised_link_model.5} parent=0 // pred_region
    _
  $region21: #{supervised_link_model.5} parent=0 // pred_fallthru
    _
  // Predicated region
  $region22: #{supervised_link_model.5} parent=0 // pred_check
    _
  $region23: #{supervised_link_model.5} parent=0 // pred_check_branch
    %24 = sbr.rel (0) target = $region25
  $region24: #{supervised_link_model.5} parent=0 // pred_region
    _
  $region25: #{supervised_link_model.5} parent=0 // pred_fallthru
    _
  // Predicated region
  $region26: #{supervised_link_model.5} parent=0 // pred_check
    _
  $region27: #{supervised_link_model.5} parent=0 // pred_check_branch
    %26 = sbr.rel (0) target = $region29
  $region28: #{supervised_link_model.5} parent=0 // pred_region
    _
  $region29: #{supervised_link_model.5} parent=0 // pred_fallthru
    _
  %v28 = vld [vmem:[%s0] sm:$0xf]
  %v29 = vld [vmem:[%s0 + $0x4] sm:$0xf]
  %v30 = vld [vmem:[%s0 + $0x8] sm:$0xf]
  %v31 = vld [vmem:[%s0 + $0xc] sm:$0xf]
  %v32 = vld [vmem:[%s0 + $0x10] sm:$0xf]
  %v33 = vld [vmem:[%s0 + $0x14] sm:$0xf]
  %v34 = vld [vmem:[%s0 + $0x18] sm:$0xf]
  %v35 = vld [vmem:[%s0 + $0x1c] sm:$0xf]
  %v36 = vld [vmem:[%s0 + $0x20] sm:$0xf]
  %v37 = vld [vmem:[%s0 + $0x24] sm:$0xf]
  %v38 = vld [vmem:[%s0 + $0x28] sm:$0xf]
  %v39 = vld [vmem:[%s0 + $0x2c] sm:$0xf]
  %v40 = vld [vmem:[%s0 + $0x30] sm:$0xf]
  %v41 = vld [vmem:[%s0 + $0x34] sm:$0xf]
  %v42 = vld [vmem:[%s0 + $0x38] sm:$0xf]
  %v43 = vld [vmem:[%s0 + $0x3c] sm:$0xf]
  %v44 = vld [vmem:[%s2] sm:$0xf]
  %v45 = vld [vmem:[%s2 + $0x4] sm:$0xf]
  %v46 = vld [vmem:[%s2 + $0x8] sm:$0xf]
  %v47 = vld [vmem:[%s2 + $0xc] sm:$0xf]
  %v48 = vld [vmem:[%s2 + $0x10] sm:$0xf]
  %v49 = vld [vmem:[%s2 + $0x14] sm:$0xf]
  %v50 = vld [vmem:[%s2 + $0x18] sm:$0xf]
  %v51 = vld [vmem:[%s2 + $0x1c] sm:$0xf]
  %v52 = vld [vmem:[%s2 + $0x20] sm:$0xf]
  %v53 = vld [vmem:[%s2 + $0x24] sm:$0xf]
  %v54 = vld [vmem:[%s2 + $0x28] sm:$0xf]
  %v55 = vld [vmem:[%s2 + $0x2c] sm:$0xf]
  %v56 = vld [vmem:[%s2 + $0x30] sm:$0xf]
  %v57 = vld [vmem:[%s2 + $0x34] sm:$0xf]
  %v58 = vld [vmem:[%s2 + $0x38] sm:$0xf]
  %v59 = vld [vmem:[%s2 + $0x3c] sm:$0xf]
  %v60 = vld [vmem:[%s1] sm:$0xf]
  %v61 = vld [vmem:[%s1 + $0x4] sm:$0xf]
  %v62 = vld [vmem:[%s1 + $0x8] sm:$0xf]
  %v63 = vld [vmem:[%s1 + $0xc] sm:$0xf]
  %v64 = vld [vmem:[%s1 + $0x10] sm:$0xf]
  %v65 = vld [vmem:[%s1 + $0x14] sm:$0xf]
  %v66 = vld [vmem:[%s1 + $0x18] sm:$0xf]
  %v67 = vld [vmem:[%s1 + $0x1c] sm:$0xf]
  %v68 = vld [vmem:[%s1 + $0x20] sm:$0xf]
  %v69 = vld [vmem:[%s1 + $0x24] sm:$0xf]
  %v70 = vld [vmem:[%s1 + $0x28] sm:$0xf]
  %v71 = vld [vmem:[%s1 + $0x2c] sm:$0xf]
  %v72 = vld [vmem:[%s1 + $0x30] sm:$0xf]
  %v73 = vld [vmem:[%s1 + $0x34] sm:$0xf]
  %v74 = vld [vmem:[%s1 + $0x38] sm:$0xf]
  %v75 = vld [vmem:[%s1 + $0x3c] sm:$0xf]
  %v76 = vld [vmem:[%s3] sm:$0xf]
  %v77 = vld [vmem:[%s3 + $0x4] sm:$0xf]
  %v78 = vld [vmem:[%s3 + $0x8] sm:$0xf]
  %v79 = vld [vmem:[%s3 + $0xc] sm:$0xf]
  %v80 = vld [vmem:[%s3 + $0x10] sm:$0xf]
  %v81 = vld [vmem:[%s3 + $0x14] sm:$0xf]
  %v82 = vld [vmem:[%s3 + $0x18] sm:$0xf]
  %v83 = vld [vmem:[%s3 + $0x1c] sm:$0xf]
  %v84 = vld [vmem:[%s3 + $0x20] sm:$0xf]
  %v85 = vld [vmem:[%s3 + $0x24] sm:$0xf]
  %v86 = vld [vmem:[%s3 + $0x28] sm:$0xf]
  %v87 = vld [vmem:[%s3 + $0x2c] sm:$0xf]
  %v88 = vld [vmem:[%s3 + $0x30] sm:$0xf]
  %v89 = vld [vmem:[%s3 + $0x34] sm:$0xf]
  %v90 = vld [vmem:[%s3 + $0x38] sm:$0xf]
  %v91 = vld [vmem:[%s3 + $0x3c] sm:$0xf]
  %v108 = vunpack.c.l.b16 %v60
  %v109 = vunpack.c.l.b16 %v61
  %v110 = vunpack.c.l.b16 %v62
  %v111 = vunpack.c.l.b16 %v63
  %v112 = vunpack.c.l.b16 %v64
  %v113 = vunpack.c.l.b16 %v65
  %v114 = vunpack.c.l.b16 %v66
  %v115 = vunpack.c.l.b16 %v67
  %v116 = vunpack.c.l.b16 %v68
  %v117 = vunpack.c.l.b16 %v69
  %v118 = vunpack.c.l.b16 %v70
  %v119 = vunpack.c.l.b16 %v71
  %v120 = vunpack.c.l.b16 %v72
  %v121 = vunpack.c.l.b16 %v73
  %v122 = vunpack.c.l.b16 %v74
  %v123 = vunpack.c.l.b16 %v75
  %v124 = vpack.c.b16 %v109, %v108
  %v125 = vpack.c.b16 %v111, %v110
  %v126 = vpack.c.b16 %v113, %v112
  %v127 = vpack.c.b16 %v115, %v114
  %v128 = vpack.c.b16 %v117, %v116
  %v129 = vpack.c.b16 %v119, %v118
  %v130 = vpack.c.b16 %v121, %v120
  %v131 = vpack.c.b16 %v123, %v122
  %v156 = vunpack.c.l.b16 %v76
  %v157 = vunpack.c.l.b16 %v77
  %v158 = vunpack.c.l.b16 %v78
  %v159 = vunpack.c.l.b16 %v79
  %v160 = vunpack.c.l.b16 %v80
  %v161 = vunpack.c.l.b16 %v81
  %v162 = vunpack.c.l.b16 %v82
  %v163 = vunpack.c.l.b16 %v83
  %v164 = vunpack.c.l.b16 %v84
  %v165 = vunpack.c.l.b16 %v85
  %v166 = vunpack.c.l.b16 %v86
  %v167 = vunpack.c.l.b16 %v87
  %v168 = vunpack.c.l.b16 %v88
  %v169 = vunpack.c.l.b16 %v89
  %v170 = vunpack.c.l.b16 %v90
  %v171 = vunpack.c.l.b16 %v91
  %v172 = vpack.c.b16 %v157, %v156
  %v173 = vpack.c.b16 %v159, %v158
  %v174 = vpack.c.b16 %v161, %v160
  %v175 = vpack.c.b16 %v163, %v162
  %v176 = vpack.c.b16 %v165, %v164
  %v177 = vpack.c.b16 %v167, %v166
  %v178 = vpack.c.b16 %v169, %v168
  %v179 = vpack.c.b16 %v171, %v170
  %188 = vmatprep.subr.bf16.mxu0 0
  %189 = vmatpush1.bf16.msra.mxu0 %v179
  %190 = vmatprep.subr.bf16.mxu0 0
  %191 = vmatpush1.bf16.msra.mxu0 %v178
  %192 = vmatprep.subr.bf16.mxu0 0
  %193 = vmatpush1.bf16.msra.mxu0 %v177
  %194 = vmatprep.subr.bf16.mxu0 0
  %195 = vmatpush1.bf16.msra.mxu0 %v176
  %196 = vmatprep.subr.bf16.mxu0 0
  %197 = vmatpush1.bf16.msra.mxu0 %v175
  %198 = vmatprep.subr.bf16.mxu0 0
  %199 = vmatpush1.bf16.msra.mxu0 %v174
  %200 = vmatprep.subr.bf16.mxu0 0
  %201 = vmatpush1.bf16.msra.mxu0 %v173
  %202 = vmatprep.subr.bf16.mxu0 0
  %203 = vmatpush1.bf16.msra.mxu0 %v172
  %204 = vmatprep.subr.bf16.mxu0 0
  %205 = vmatpush2.bf16.msra.mxu0 0
  %206 = vmatprep.subr.bf16.mxu0 0
  %207 = vmatpush2.bf16.msra.mxu0 0
  %208 = vmatprep.subr.bf16.mxu0 0
  %209 = vmatpush2.bf16.msra.mxu0 0
  %210 = vmatprep.subr.bf16.mxu0 0
  %211 = vmatpush2.bf16.msra.mxu0 0
  %212 = vmatprep.subr.bf16.mxu0 0
  %213 = vmatpush2.bf16.msra.mxu0 0
  %214 = vmatprep.subr.bf16.mxu0 0
  %215 = vmatpush2.bf16.msra.mxu0 0
  %216 = vmatprep.subr.bf16.mxu0 0
  %217 = vmatpush2.bf16.msra.mxu0 0
  %218 = vmatprep.subr.bf16.mxu0 0
  %219 = vmatpush2.bf16.msra.mxu0 0
  %220 = vmatprep.mubr.bf16.mxu0 0
  %221 = vmatmul.mubr.bf16.gmra.mxu0 %v124
  %v222 = vpop.f32.mrf.mxu0
  %v223 = vadd.f32 0.0, %v222
  %v224 = vpop.f32.mrf.mxu0
  %v225 = vpop.f32.mrf.mxu0
  %v226 = vadd.f32 0.0, %v225
  %v227 = vpop.f32.mrf.mxu0
  %228 = vmatprep.mubr.bf16.mxu0 0
  %229 = vmatmul.mubr.bf16.gmra.mxu0 %v125
  %v230 = vpop.f32.mrf.mxu0
  %v231 = vadd.f32 0.0, %v230
  %v232 = vpop.f32.mrf.mxu0
  %v233 = vpop.f32.mrf.mxu0
  %v234 = vadd.f32 0.0, %v233
  %v235 = vpop.f32.mrf.mxu0
  %236 = vmatprep.mubr.bf16.mxu0 0
  %237 = vmatmul.mubr.bf16.gmra.mxu0 %v126
  %v238 = vpop.f32.mrf.mxu0
  %v239 = vadd.f32 0.0, %v238
  %v240 = vpop.f32.mrf.mxu0
  %v241 = vpop.f32.mrf.mxu0
  %v242 = vadd.f32 0.0, %v241
  %v243 = vpop.f32.mrf.mxu0
  %244 = vmatprep.mubr.bf16.mxu0 0
  %245 = vmatmul.mubr.bf16.gmra.mxu0 %v127
  %v246 = vpop.f32.mrf.mxu0
  %v247 = vadd.f32 0.0, %v246
  %v248 = vpop.f32.mrf.mxu0
  %v249 = vpop.f32.mrf.mxu0
  %v250 = vadd.f32 0.0, %v249
  %v251 = vpop.f32.mrf.mxu0
  %252 = vmatprep.mubr.bf16.mxu0 0
  %253 = vmatmul.mubr.bf16.gmra.mxu0 %v128
  %v254 = vpop.f32.mrf.mxu0
  %v255 = vadd.f32 0.0, %v254
  %v256 = vpop.f32.mrf.mxu0
  %v257 = vpop.f32.mrf.mxu0
  %v258 = vadd.f32 0.0, %v257
  %v259 = vpop.f32.mrf.mxu0
  %260 = vmatprep.mubr.bf16.mxu0 0
  %261 = vmatmul.mubr.bf16.gmra.mxu0 %v129
  %v262 = vpop.f32.mrf.mxu0
  %v263 = vadd.f32 0.0, %v262
  %v264 = vpop.f32.mrf.mxu0
  %v265 = vpop.f32.mrf.mxu0
  %v266 = vadd.f32 0.0, %v265
  %v267 = vpop.f32.mrf.mxu0
  %268 = vmatprep.mubr.bf16.mxu0 0
  %269 = vmatmul.mubr.bf16.gmra.mxu0 %v130
  %v270 = vpop.f32.mrf.mxu0
  %v271 = vadd.f32 0.0, %v270
  %v272 = vpop.f32.mrf.mxu0
  %v273 = vpop.f32.mrf.mxu0
  %v274 = vadd.f32 0.0, %v273
  %v275 = vpop.f32.mrf.mxu0
  %276 = vmatprep.mubr.bf16.mxu0 0
  %277 = vmatmul.mubr.bf16.gmra.mxu0 %v131
  %v278 = vpop.f32.mrf.mxu0
  %v279 = vadd.f32 0.0, %v278
  %v280 = vpop.f32.mrf.mxu0
  %v281 = vpop.f32.mrf.mxu0
  %v282 = vadd.f32 0.0, %v281
  %v283 = vpop.f32.mrf.mxu0
  %284 = vdwg.mxu0
  %v301 = vunpack.c.l.b16 %v28
  %v302 = vunpack.c.l.b16 %v29
  %v303 = vunpack.c.l.b16 %v30
  %v304 = vunpack.c.l.b16 %v31
  %v305 = vunpack.c.l.b16 %v32
  %v306 = vunpack.c.l.b16 %v33
  %v307 = vunpack.c.l.b16 %v34
  %v308 = vunpack.c.l.b16 %v35
  %v309 = vunpack.c.l.b16 %v36
  %v310 = vunpack.c.l.b16 %v37
  %v311 = vunpack.c.l.b16 %v38
  %v312 = vunpack.c.l.b16 %v39
  %v313 = vunpack.c.l.b16 %v40
  %v314 = vunpack.c.l.b16 %v41
  %v315 = vunpack.c.l.b16 %v42
  %v316 = vunpack.c.l.b16 %v43
  %v317 = vpack.c.b16 %v302, %v301
  %v318 = vpack.c.b16 %v304, %v303
  %v319 = vpack.c.b16 %v306, %v305
  %v320 = vpack.c.b16 %v308, %v307
  %v321 = vpack.c.b16 %v310, %v309
  %v322 = vpack.c.b16 %v312, %v311
  %v323 = vpack.c.b16 %v314, %v313
  %v324 = vpack.c.b16 %v316, %v315
  %v349 = vunpack.c.l.b16 %v44
  %v350 = vunpack.c.l.b16 %v45
  %v351 = vunpack.c.l.b16 %v46
  %v352 = vunpack.c.l.b16 %v47
  %v353 = vunpack.c.l.b16 %v48
  %v354 = vunpack.c.l.b16 %v49
  %v355 = vunpack.c.l.b16 %v50
  %v356 = vunpack.c.l.b16 %v51
  %v357 = vunpack.c.l.b16 %v52
  %v358 = vunpack.c.l.b16 %v53
  %v359 = vunpack.c.l.b16 %v54
  %v360 = vunpack.c.l.b16 %v55
  %v361 = vunpack.c.l.b16 %v56
  %v362 = vunpack.c.l.b16 %v57
  %v363 = vunpack.c.l.b16 %v58
  %v364 = vunpack.c.l.b16 %v59
  %v365 = vpack.c.b16 %v350, %v349
  %v366 = vpack.c.b16 %v352, %v351
  %v367 = vpack.c.b16 %v354, %v353
  %v368 = vpack.c.b16 %v356, %v355
  %v369 = vpack.c.b16 %v358, %v357
  %v370 = vpack.c.b16 %v360, %v359
  %v371 = vpack.c.b16 %v362, %v361
  %v372 = vpack.c.b16 %v364, %v363
  %381 = vmatprep.subr.bf16.mxu0 0
  %382 = vmatpush1.bf16.msra.mxu0 %v372
  %383 = vmatprep.subr.bf16.mxu0 0
  %384 = vmatpush1.bf16.msra.mxu0 %v371
  %385 = vmatprep.subr.bf16.mxu0 0
  %386 = vmatpush1.bf16.msra.mxu0 %v370
  %387 = vmatprep.subr.bf16.mxu0 0
  %388 = vmatpush1.bf16.msra.mxu0 %v369
  %389 = vmatprep.subr.bf16.mxu0 0
  %390 = vmatpush1.bf16.msra.mxu0 %v368
  %391 = vmatprep.subr.bf16.mxu0 0
  %392 = vmatpush1.bf16.msra.mxu0 %v367
  %393 = vmatprep.subr.bf16.mxu0 0
  %394 = vmatpush1.bf16.msra.mxu0 %v366
  %395 = vmatprep.subr.bf16.mxu0 0
  %396 = vmatpush1.bf16.msra.mxu0 %v365
  %397 = vmatprep.subr.bf16.mxu0 0
  %398 = vmatpush2.bf16.msra.mxu0 0
  %399 = vmatprep.subr.bf16.mxu0 0
  %400 = vmatpush2.bf16.msra.mxu0 0
  %401 = vmatprep.subr.bf16.mxu0 0
  %402 = vmatpush2.bf16.msra.mxu0 0
  %403 = vmatprep.subr.bf16.mxu0 0
  %404 = vmatpush2.bf16.msra.mxu0 0
  %405 = vmatprep.subr.bf16.mxu0 0
  %406 = vmatpush2.bf16.msra.mxu0 0
  %407 = vmatprep.subr.bf16.mxu0 0
  %408 = vmatpush2.bf16.msra.mxu0 0
  %409 = vmatprep.subr.bf16.mxu0 0
  %410 = vmatpush2.bf16.msra.mxu0 0
  %411 = vmatprep.subr.bf16.mxu0 0
  %412 = vmatpush2.bf16.msra.mxu0 0
  %413 = vmatprep.mubr.bf16.mxu0 0
  %414 = vmatmul.mubr.bf16.gmra.mxu0 %v317
  %v415 = vpop.f32.mrf.mxu0
  %v416 = vadd.f32 %v223, %v415
  %v417 = vpop.f32.mrf.mxu0
  %v418 = vpop.f32.mrf.mxu0
  %v419 = vadd.f32 %v226, %v418
  %v420 = vpop.f32.mrf.mxu0
  %421 = vmatprep.mubr.bf16.mxu0 0
  %422 = vmatmul.mubr.bf16.gmra.mxu0 %v318
  %v423 = vpop.f32.mrf.mxu0
  %v424 = vadd.f32 %v231, %v423
  %v425 = vpop.f32.mrf.mxu0
  %v426 = vpop.f32.mrf.mxu0
  %v427 = vadd.f32 %v234, %v426
  %v428 = vpop.f32.mrf.mxu0
  %429 = vmatprep.mubr.bf16.mxu0 0
  %430 = vmatmul.mubr.bf16.gmra.mxu0 %v319
  %v431 = vpop.f32.mrf.mxu0
  %v432 = vadd.f32 %v239, %v431
  %v433 = vpop.f32.mrf.mxu0
  %v434 = vpop.f32.mrf.mxu0
  %v435 = vadd.f32 %v242, %v434
  %v436 = vpop.f32.mrf.mxu0
  %437 = vmatprep.mubr.bf16.mxu0 0
  %438 = vmatmul.mubr.bf16.gmra.mxu0 %v320
  %v439 = vpop.f32.mrf.mxu0
  %v440 = vadd.f32 %v247, %v439
  %v441 = vpop.f32.mrf.mxu0
  %v442 = vpop.f32.mrf.mxu0
  %v443 = vadd.f32 %v250, %v442
  %v444 = vpop.f32.mrf.mxu0
  %445 = vmatprep.mubr.bf16.mxu0 0
  %446 = vmatmul.mubr.bf16.gmra.mxu0 %v321
  %v447 = vpop.f32.mrf.mxu0
  %v448 = vadd.f32 %v255, %v447
  %v449 = vpop.f32.mrf.mxu0
  %v450 = vpop.f32.mrf.mxu0
  %v451 = vadd.f32 %v258, %v450
  %v452 = vpop.f32.mrf.mxu0
  %453 = vmatprep.mubr.bf16.mxu0 0
  %454 = vmatmul.mubr.bf16.gmra.mxu0 %v322
  %v455 = vpop.f32.mrf.mxu0
  %v456 = vadd.f32 %v263, %v455
  %v457 = vpop.f32.mrf.mxu0
  %v458 = vpop.f32.mrf.mxu0
  %v459 = vadd.f32 %v266, %v458
  %v460 = vpop.f32.mrf.mxu0
  %461 = vmatprep.mubr.bf16.mxu0 0
  %462 = vmatmul.mubr.bf16.gmra.mxu0 %v323
  %v463 = vpop.f32.mrf.mxu0
  %v464 = vadd.f32 %v271, %v463
  %v465 = vpop.f32.mrf.mxu0
  %v466 = vpop.f32.mrf.mxu0
  %v467 = vadd.f32 %v274, %v466
  %v468 = vpop.f32.mrf.mxu0
  %469 = vmatprep.mubr.bf16.mxu0 0
  %470 = vmatmul.mubr.bf16.gmra.mxu0 %v324
  %v471 = vpop.f32.mrf.mxu0
  %v472 = vadd.f32 %v279, %v471
  %v473 = vpop.f32.mrf.mxu0
  %v474 = vpop.f32.mrf.mxu0
  %v475 = vadd.f32 %v282, %v474
  %v476 = vpop.f32.mrf.mxu0
  %477 = vdwg.mxu0
  %v478 = vld [vmem:[%s4] sm:$0x1]
  %v480 = vlaneseq
  %v481 = vshrl.u32 %v480, 7
  %v482 = vsub.s32 0, %v481
  %v483 = vrot.slane %v478, %v482
  %v485 = vadd.f32 %v416, %v483
  %v486 = vadd.f32 %v419, %v483
  %v487 = vadd.f32 %v424, %v483
  %v488 = vadd.f32 %v427, %v483
  %v489 = vadd.f32 %v432, %v483
  %v490 = vadd.f32 %v435, %v483
  %v491 = vadd.f32 %v440, %v483
  %v492 = vadd.f32 %v443, %v483
  %v493 = vadd.f32 %v448, %v483
  %v494 = vadd.f32 %v451, %v483
  %v495 = vadd.f32 %v456, %v483
  %v496 = vadd.f32 %v459, %v483
  %v497 = vadd.f32 %v464, %v483
  %v498 = vadd.f32 %v467, %v483
  %v499 = vadd.f32 %v472, %v483
  %v500 = vadd.f32 %v475, %v483
  %v501 = vmax.f32 %v485, 0.0
  %v502 = vmax.f32 %v486, 0.0
  %v503 = vmax.f32 %v487, 0.0
  %v504 = vmax.f32 %v488, 0.0
  %v505 = vmax.f32 %v489, 0.0
  %v506 = vmax.f32 %v490, 0.0
  %v507 = vmax.f32 %v491, 0.0
  %v508 = vmax.f32 %v492, 0.0
  %v509 = vmax.f32 %v493, 0.0
  %v510 = vmax.f32 %v494, 0.0
  %v511 = vmax.f32 %v495, 0.0
  %v512 = vmax.f32 %v496, 0.0
  %v513 = vmax.f32 %v497, 0.0
  %v514 = vmax.f32 %v498, 0.0
  %v515 = vmax.f32 %v499, 0.0
  %v516 = vmax.f32 %v500, 0.0
  %v517 = vld [vmem:[%s5] sm:$0x1]
  %v519 = vlaneseq
  %v520 = vshrl.u32 %v519, 7
  %v521 = vsub.s32 0, %v520
  %v522 = vrot.slane %v517, %v521
  %v524 = vmul.f32 %v501, %v522
  %v525 = vmul.f32 %v502, %v522
  %v526 = vmul.f32 %v503, %v522
  %v527 = vmul.f32 %v504, %v522
  %v528 = vmul.f32 %v505, %v522
  %v529 = vmul.f32 %v506, %v522
  %v530 = vmul.f32 %v507, %v522
  %v531 = vmul.f32 %v508, %v522
  %v532 = vmul.f32 %v509, %v522
  %v533 = vmul.f32 %v510, %v522
  %v534 = vmul.f32 %v511, %v522
  %v535 = vmul.f32 %v512, %v522
  %v536 = vmul.f32 %v513, %v522
  %v537 = vmul.f32 %v514, %v522
  %v538 = vmul.f32 %v515, %v522
  %v539 = vmul.f32 %v516, %v522
  %540 = vadd.xlane.f32.xlu0 %v524
  %v541 = vpop.xlane.xlu0 %540
  %542 = vadd.xlane.f32.xlu0 %v525
  %v543 = vpop.xlane.xlu0 %542
  %544 = vadd.xlane.f32.xlu0 %v526
  %v545 = vpop.xlane.xlu0 %544
  %546 = vadd.xlane.f32.xlu0 %v527
  %v547 = vpop.xlane.xlu0 %546
  %548 = vadd.xlane.f32.xlu0 %v528
  %v549 = vpop.xlane.xlu0 %548
  %550 = vadd.xlane.f32.xlu0 %v529
  %v551 = vpop.xlane.xlu0 %550
  %552 = vadd.xlane.f32.xlu0 %v530
  %v553 = vpop.xlane.xlu0 %552
  %554 = vadd.xlane.f32.xlu0 %v531
  %v555 = vpop.xlane.xlu0 %554
  %556 = vadd.xlane.f32.xlu0 %v532
  %v557 = vpop.xlane.xlu0 %556
  %558 = vadd.xlane.f32.xlu0 %v533
  %v559 = vpop.xlane.xlu0 %558
  %560 = vadd.xlane.f32.xlu0 %v534
  %v561 = vpop.xlane.xlu0 %560
  %562 = vadd.xlane.f32.xlu0 %v535
  %v563 = vpop.xlane.xlu0 %562
  %564 = vadd.xlane.f32.xlu0 %v536
  %v565 = vpop.xlane.xlu0 %564
  %566 = vadd.xlane.f32.xlu0 %v537
  %v567 = vpop.xlane.xlu0 %566
  %568 = vadd.xlane.f32.xlu0 %v538
  %v569 = vpop.xlane.xlu0 %568
  %570 = vadd.xlane.f32.xlu0 %v539
  %v571 = vpop.xlane.xlu0 %570
  %s572 = sld [smem:[#allocation2]]
  %v573 = vstv %s572
  %v574 = vadd.f32 %v541, %v573
  %v575 = vadd.f32 %v543, %v573
  %v576 = vadd.f32 %v545, %v573
  %v577 = vadd.f32 %v547, %v573
  %v578 = vadd.f32 %v549, %v573
  %v579 = vadd.f32 %v551, %v573
  %v580 = vadd.f32 %v553, %v573
  %v581 = vadd.f32 %v555, %v573
  %v582 = vadd.f32 %v557, %v573
  %v583 = vadd.f32 %v559, %v573
  %v584 = vadd.f32 %v561, %v573
  %v585 = vadd.f32 %v563, %v573
  %v586 = vadd.f32 %v565, %v573
  %v587 = vadd.f32 %v567, %v573
  %v588 = vadd.f32 %v569, %v573
  %v589 = vadd.f32 %v571, %v573
  %v606 = vlaneseq
  %v607 = vand.u32 %v606, 127
  %v608 = vlaneseq
  %v609 = vshrl.u32 %v608, 7
  %v610 = vsub.s32 %v607, %v609
  %v611 = vrot.slane %v574, %v610
  %v612 = vadd.s32 %v607, 4294967288
  %v613 = vlaneseq
  %v614 = vshrl.u32 %v613, 7
  %v615 = vsub.s32 %v612, %v614
  %v616 = vrot.slane %v575, %v615
  %vm617 = vcmask 130112
  %v618 = vsel %vm617, %v616, %v611
  %v619 = vadd.s32 %v607, 4294967280
  %v620 = vlaneseq
  %v621 = vshrl.u32 %v620, 7
  %v622 = vsub.s32 %v619, %v621
  %v623 = vrot.slane %v576, %v622
  %vm624 = vcmask 195712
  %v625 = vsel %vm624, %v623, %v618
  %v626 = vadd.s32 %v607, 4294967272
  %v627 = vlaneseq
  %v628 = vshrl.u32 %v627, 7
  %v629 = vsub.s32 %v626, %v628
  %v630 = vrot.slane %v577, %v629
  %vm631 = vcmask 261312
  %v632 = vsel %vm631, %v630, %v625
  %v633 = vadd.s32 %v607, 4294967264
  %v634 = vlaneseq
  %v635 = vshrl.u32 %v634, 7
  %v636 = vsub.s32 %v633, %v635
  %v637 = vrot.slane %v578, %v636
  %vm638 = vcmask 326912
  %v639 = vsel %vm638, %v637, %v632
  %v640 = vadd.s32 %v607, 4294967256
  %v641 = vlaneseq
  %v642 = vshrl.u32 %v641, 7
  %v643 = vsub.s32 %v640, %v642
  %v644 = vrot.slane %v579, %v643
  %vm645 = vcmask 392512
  %v646 = vsel %vm645, %v644, %v639
  %v647 = vadd.s32 %v607, 4294967248
  %v648 = vlaneseq
  %v649 = vshrl.u32 %v648, 7
  %v650 = vsub.s32 %v647, %v649
  %v651 = vrot.slane %v580, %v650
  %vm652 = vcmask 458112
  %v653 = vsel %vm652, %v651, %v646
  %v654 = vadd.s32 %v607, 4294967240
  %v655 = vlaneseq
  %v656 = vshrl.u32 %v655, 7
  %v657 = vsub.s32 %v654, %v656
  %v658 = vrot.slane %v581, %v657
  %vm659 = vcmask 523712
  %v660 = vsel %vm659, %v658, %v653
  %v661 = vadd.s32 %v607, 4294967232
  %v662 = vlaneseq
  %v663 = vshrl.u32 %v662, 7
  %v664 = vsub.s32 %v661, %v663
  %v665 = vrot.slane %v582, %v664
  %vm666 = vcmask 589312
  %v667 = vsel %vm666, %v665, %v660
  %v668 = vadd.s32 %v607, 4294967224
  %v669 = vlaneseq
  %v670 = vshrl.u32 %v669, 7
  %v671 = vsub.s32 %v668, %v670
  %v672 = vrot.slane %v583, %v671
  %vm673 = vcmask 654912
  %v674 = vsel %vm673, %v672, %v667
  %v675 = vadd.s32 %v607, 4294967216
  %v676 = vlaneseq
  %v677 = vshrl.u32 %v676, 7
  %v678 = vsub.s32 %v675, %v677
  %v679 = vrot.slane %v584, %v678
  %vm680 = vcmask 720512
  %v681 = vsel %vm680, %v679, %v674
  %v682 = vadd.s32 %v607, 4294967208
  %v683 = vlaneseq
  %v684 = vshrl.u32 %v683, 7
  %v685 = vsub.s32 %v682, %v684
  %v686 = vrot.slane %v585, %v685
  %vm687 = vcmask 786112
  %v688 = vsel %vm687, %v686, %v681
  %v689 = vadd.s32 %v607, 4294967200
  %v690 = vlaneseq
  %v691 = vshrl.u32 %v690, 7
  %v692 = vsub.s32 %v689, %v691
  %v693 = vrot.slane %v586, %v692
  %vm694 = vcmask 851712
  %v695 = vsel %vm694, %v693, %v688
  %v696 = vadd.s32 %v607, 4294967192
  %v697 = vlaneseq
  %v698 = vshrl.u32 %v697, 7
  %v699 = vsub.s32 %v696, %v698
  %v700 = vrot.slane %v587, %v699
  %vm701 = vcmask 917312
  %v702 = vsel %vm701, %v700, %v695
  %v703 = vadd.s32 %v607, 4294967184
  %v704 = vlaneseq
  %v705 = vshrl.u32 %v704, 7
  %v706 = vsub.s32 %v703, %v705
  %v707 = vrot.slane %v588, %v706
  %vm708 = vcmask 982912
  %v709 = vsel %vm708, %v707, %v702
  %v710 = vadd.s32 %v607, 4294967176
  %v711 = vlaneseq
  %v712 = vshrl.u32 %v711, 7
  %v713 = vsub.s32 %v710, %v712
  %v714 = vrot.slane %v589, %v713
  %vm715 = vcmask 1048512
  %v716 = vsel %vm715, %v714, %v709
  %718 = vst [vmem:[%s7] sm:$0x1] %v716
  // Predicated region
  $region30: #{supervised_link_model.5} parent=0 // pred_check
    _
  $region31: #{supervised_link_model.5} parent=0 // pred_check_branch
    %720 = sbr.rel (0) target = $region33
  $region32: #{supervised_link_model.5} parent=0 // pred_region
    _
  $region33: #{supervised_link_model.5} parent=0 // pred_fallthru
    _
  // Predicated region
  $region34: #{supervised_link_model.5} parent=0 // pred_check
    _
  $region35: #{supervised_link_model.5} parent=0 // pred_check_branch
    %722 = sbr.rel (0) target = $region37
  $region36: #{supervised_link_model.5} parent=0 // pred_region
    _
  $region37: #{supervised_link_model.5} parent=0 // pred_fallthru
    _

</llo_original>
